<compile_context>
chip_gen: v7x
topology: tpu7x:2x2x1
jax: 0.10.0
libtpu: 0.0.40
codegen_flags: <defaults>
</compile_context>

<pallas_src>
import jax
import jax.numpy as jnp
from jax.experimental import pallas as pl
from jax.experimental.pallas import tpu as pltpu

KH = KW = 3            # kernel_size = 3
PAD = KH // 2          # padding = 1 ('SAME')


# ----------------------------- Pallas kernel ------------------------------ #
def subpixel_conv_kernel(x_ref, w_ref, b_ref, alpha_ref, o_ref):
    # x_ref:     (Hp, N, Wp, C)   full zero-padded input, resident across grid
    # w_ref:     (KW, OC, KH*C)   conv weights; per-kw tap, columns (kh, c)
    # b_ref:     (OC, 1)          conv bias (f32)
    # alpha_ref: (1,)             PReLU alpha, SMEM scalar
    # o_ref:     (OC, TH*N*W)     lane-dense output slab for this H tile
    Hp, N, Wp, C = x_ref.shape
    OC = w_ref.shape[1]
    Mt = o_ref.shape[1]
    W = Wp - 2 * PAD
    TH = Mt // (N * W)
    h0 = pl.multiple_of(pl.program_id(0) * TH, TH)

    acc = None
    for kw in range(KW):
        # One misaligned sub-lane (width) shift per kw, sliced directly off the
        # ref (no whole-tile copy); the kh taps are free major-dim slices of it.
        sh = x_ref[pl.ds(h0, TH + 2 * PAD), :, pl.ds(kw, W), :]   # (TH+2, N, W, C)
        patch = jnp.concatenate([sh[kh:kh + TH] for kh in range(KH)], axis=-1)
        # NOTE: this collapse is layout-preserving (free) only when W % 8 == 0
        # for f32 (W % 16 for bf16); otherwise XLA inserts a relayout copy
        # (perf-only, still correct).
        patch = patch.reshape(Mt, KH * C)                         # (Mt, 3*C)
        # (OC, 3C) x (Mt, 3C)^T -> (OC, Mt); native-dtype operands, f32 accum.
        d = jax.lax.dot_general(
            w_ref[kw], patch,
            dimension_numbers=(((1,), (1,)), ((), ())),
            preferred_element_type=jnp.float32)
        acc = d if acc is None else acc + d

    acc = acc + b_ref[...].astype(jnp.float32)                    # per-OC bias
    alpha = alpha_ref[0]                                          # SMEM scalar
    acc = jnp.where(acc >= 0.0, acc, alpha * acc)                 # PReLU
    o_ref[...] = acc.astype(o_ref.dtype)


# --------------------------- Tiling heuristics ----------------------------- #
def _tile_vmem_bytes(th, N, W, C, OC, itemsize):
    """Approximate per-tile VMEM footprint of the kernel body."""
    mt = th * N * W
    patch = mt * KH * C * itemsize                 # live per-kw im2col patch
    shifted = (th + 2 * PAD) * N * W * C * itemsize
    acc = OC * mt * 4                              # f32 accumulator
    outb = 2 * OC * mt * itemsize                  # double-buffered output block
    return patch + shifted + acc + outb


def _choose_tile_h(H, N, W, C, OC, itemsize, budget):
    """Largest H tile (fewest grid steps) whose footprint fits the budget."""
    if _tile_vmem_bytes(H, N, W, C, OC, itemsize) <= budget:
        return H                                   # single grid step: least overhead
    for gh in range(2, H + 1):
        if H % gh:
            continue
        th = H // gh
        if (th * N * W) % 128 != 0:                # keep output block lane-aligned
            continue
        if _tile_vmem_bytes(th, N, W, C, OC, itemsize) <= budget:
            return th
    return H


# ------------------------------ Wrapper ----------------------------------- #
def subpixel_block_forward(x_nchw, weight, bias, alpha, scaling_factor=2):
    """x_nchw: (N, C, H, W) -> (N, C, H*s, W*s), matching the PyTorch module."""
    N, C, H, W = x_nchw.shape
    OC = weight.shape[0]                 # = C * s^2
    s = scaling_factor
    Cout = OC // (s * s)
    Hp, Wp = H + 2 * PAD, W + 2 * PAD
    itemsize = x_nchw.dtype.itemsize

    alpha = jnp.asarray(alpha, jnp.float32).reshape(-1)
    assert alpha.size == 1, "kernel implements nn.PReLU() with one shared alpha"

    # NCHW -> (H, N, W, C): H leads so the halo slice is a major-dim slice;
    # C maps to lanes for the im2col contraction.
    x_t = jnp.transpose(x_nchw, (2, 0, 3, 1))
    x_pad = jnp.pad(x_t, ((PAD, PAD), (0, 0), (PAD, PAD), (0, 0)))

    # (OC, C, KH, KW) -> (KW, OC, KH*C): contiguous weight tap per kw, columns
    # ordered (kh, c) to match the in-kernel tap concatenation.
    w_t = jnp.transpose(weight, (3, 0, 2, 1)).reshape(KW, OC, KH * C)
    b = bias.reshape(OC, 1).astype(jnp.float32)

    # H tiling only when the tile footprint would blow a conservative VMEM
    # budget (sized for v7x 64 MiB physical / v5e 16 MiB default-scoped VMEM).
    VMEM_BUDGET = 12 * 1024 * 1024
    TH = _choose_tile_h(H, N, W, C, OC, itemsize, VMEM_BUDGET)
    GH = H // TH
    Mt = TH * N * W

    resident_bytes = (x_pad.size + w_t.size) * itemsize + b.size * 4
    out_bytes = OC * H * N * W * itemsize
    vmem_limit = int(min(
        max(2 * (resident_bytes + _tile_vmem_bytes(TH, N, W, C, OC, itemsize)),
            16 * 1024 * 1024),
        48 * 1024 * 1024))

    cost = pl.CostEstimate(
        flops=2 * OC * KH * KW * C * H * N * W,
        transcendentals=0,
        bytes_accessed=int(resident_bytes + out_bytes))

    def resident(shape):
        # Grid-invariant operands: skip double-buffering when the grid is split.
        if GH > 1:
            return pl.BlockSpec(shape, lambda *_: (0,) * len(shape),
                                pipeline_mode=pl.Buffered(1))
        return pl.BlockSpec(shape, lambda *_: (0,) * len(shape))

    conv_t = pl.pallas_call(
        subpixel_conv_kernel,
        out_shape=jax.ShapeDtypeStruct((OC, H * N * W), x_nchw.dtype),
        grid=(GH,),
        in_specs=[
            resident((Hp, N, Wp, C)),                            # resident input
            resident((KW, OC, KH * C)),                          # resident weights
            resident((OC, 1)),                                   # resident bias
            pl.BlockSpec(memory_space=pltpu.MemorySpace.SMEM),   # alpha scalar
        ],
        out_specs=pl.BlockSpec((OC, Mt), lambda i: (0, i)),
        compiler_params=pltpu.CompilerParams(
            dimension_semantics=("arbitrary",),
            vmem_limit_bytes=vmem_limit),
        cost_estimate=cost,
    )(x_pad, w_t, b, alpha)

    # conv_t[oc, (h*N + n)*W + w] == Conv2d(x)[n, oc, h, w] (bias + PReLU applied).
    # PixelShuffle + return-to-NCHW fused into ONE XLA transpose.
    y = conv_t.reshape(Cout, s, s, H, N, W)        # [c, i, j, h, n, w]
    y = jnp.transpose(y, (4, 0, 3, 1, 5, 2))       # [n, c, h, i, w, j]
    return y.reshape(N, Cout, H * s, W * s)


# ------------------- Deterministic parameter construction ----------------- #
def icnr_weight(key, n_channels, s):
    """ICNR init: each group of s^2 output channels shares one kaiming-normal
    3x3 subkernel (checkerboard-free init), matching the PyTorch ICNR()."""
    fan_in = n_channels * KH * KW
    std = (2.0 / fan_in) ** 0.5          # kaiming_normal_, a=0, fan_in mode
    sub = jax.random.normal(key, (n_channels, n_channels, KH, KW),
                            jnp.float32) * std
    return jnp.repeat(sub, s * s, axis=0)          # (C*s^2, C, KH, KW)


# ------------------------------ Reference ---------------------------------- #
def reference_forward(x_nchw, weight, bias, alpha, s):
    N, C, H, W = x_nchw.shape
    out = jax.lax.conv_general_dilated(
        x_nchw, weight, window_strides=(1, 1), padding="SAME",
        dimension_numbers=("NCHW", "OIHW", "NCHW"))
    out = out + bias[None, :, None, None]
    Cout = weight.shape[0] // (s * s)
    out = out.reshape(N, Cout, s, s, H, W)
    out = jnp.transpose(out, (0, 1, 4, 2, 5, 3)).reshape(N, Cout, H * s, W * s)
    return jnp.where(out >= 0.0, out, alpha * out)


# --------------------------------- Main ------------------------------------ #
if __name__ == "__main__":
    n_channels = 8
    scaling_factor = 2
    N, H, W = 2, 16, 16

    key = jax.random.PRNGKey(0)
    k_x, k_w, k_b = jax.random.split(key, 3)

    x = jax.random.normal(k_x, (N, n_channels, H, W), jnp.float32)
    weight = icnr_weight(k_w, n_channels, scaling_factor)
    fan_in = n_channels * KH * KW
    bound = 1.0 / (fan_in ** 0.5)
    bias = jax.random.uniform(k_b, (n_channels * scaling_factor ** 2,),
                              jnp.float32, minval=-bound, maxval=bound)
    alpha = jnp.float32(0.25)            # nn.PReLU() default init

    out = subpixel_block_forward(x, weight, bias, alpha, scaling_factor)
    out = jax.block_until_ready(out)

    assert out.shape == (N, n_channels, H * scaling_factor, W * scaling_factor)

    ref = reference_forward(x, weight, bias, alpha, scaling_factor)
    assert jnp.allclose(out, ref, atol=1e-4, rtol=1e-4), (
        float(jnp.max(jnp.abs(out - ref))))

    print("KERNEL_OK")
</pallas_src>

<mosaic_0001>
module attributes {stable_mosaic.version = 11 : i64} {
  func.func @subpixel_conv_kernel(%arg0: i32, %arg1: memref<18x2x18x8xf32, #tpu.memory_space<vmem>>, %arg2: memref<3x32x24xf32, #tpu.memory_space<vmem>>, %arg3: memref<32x1xf32, #tpu.memory_space<vmem>>, %arg4: memref<1xf32, #tpu.memory_space<smem>>, %arg5: memref<32x512xf32, #tpu.memory_space<vmem>>) attributes {dimension_semantics = [#tpu.dimension_semantics<arbitrary>], iteration_bounds = array<i64: 1>, scalar_prefetch = 0 : i64, scratch_operands = 0 : i64, tpu.core_type = #tpu.core_type<tc>, window_params = [{pipeline_mode = #tpu.pipeline_mode<synchronous>, transform_indices = @transform_0, window_bounds = array<i64: 18, 2, 18, 8>}, {pipeline_mode = #tpu.pipeline_mode<synchronous>, transform_indices = @transform_1, window_bounds = array<i64: 3, 32, 24>}, {pipeline_mode = #tpu.pipeline_mode<synchronous>, transform_indices = @transform_2, window_bounds = array<i64: 32, 1>}, {transform_indices = @transform_3, window_bounds = array<i64: 1>}, {transform_indices = @transform_4, window_bounds = array<i64: 32, 512>}]} {
    %c16_i32 = arith.constant 16 : i32
    %0 = arith.muli %arg0, %c16_i32 : i32
    %1 = tpu.assume_multiple %0, 16 : i32
    %2 = arith.index_cast %1 : i32 to index
    %c0 = arith.constant 0 : index
    %c0_0 = arith.constant 0 : index
    %c0_1 = arith.constant 0 : index
    %3 = vector.load %arg1[%2, %c0, %c0_0, %c0_1] : memref<18x2x18x8xf32, #tpu.memory_space<vmem>>, vector<18x2x16x8xf32>
    %4 = vector.extract_strided_slice %3 {offsets = [0, 0, 0, 0], sizes = [16, 2, 16, 8], strides = [1, 1, 1, 1]} : vector<18x2x16x8xf32> to vector<16x2x16x8xf32>
    %5 = vector.extract_strided_slice %3 {offsets = [1, 0, 0, 0], sizes = [16, 2, 16, 8], strides = [1, 1, 1, 1]} : vector<18x2x16x8xf32> to vector<16x2x16x8xf32>
    %6 = vector.extract_strided_slice %3 {offsets = [2, 0, 0, 0], sizes = [16, 2, 16, 8], strides = [1, 1, 1, 1]} : vector<18x2x16x8xf32> to vector<16x2x16x8xf32>
    %7 = tpu.concatenate %4, %5, %6 in 3 : vector<16x2x16x8xf32>, vector<16x2x16x8xf32>, vector<16x2x16x8xf32> -> vector<16x2x16x24xf32>
    %8 = vector.shape_cast %7 : vector<16x2x16x24xf32> to vector<512x24xf32>
    %c0_2 = arith.constant 0 : index
    %c0_3 = arith.constant 0 : index
    %c0_4 = arith.constant 0 : index
    %9 = vector.load %arg2[%c0_2, %c0_3, %c0_4] : memref<3x32x24xf32, #tpu.memory_space<vmem>>, vector<1x32x24xf32>
    %10 = vector.shape_cast %9 : vector<1x32x24xf32> to vector<32x24xf32>
    %cst = arith.constant dense<0.000000e+00> : vector<32x512xf32>
    %11 = tpu.matmul %10, %8, %cst {dimension_numbers = #tpu.dot_dimension_numbers<[1], [1], [0], [0], [0, 0, 1, 0], [], []>} : vector<32x24xf32>, vector<512x24xf32>, vector<32x512xf32> -> vector<32x512xf32>
    %12 = arith.index_cast %1 : i32 to index
    %c0_5 = arith.constant 0 : index
    %c1 = arith.constant 1 : index
    %c0_6 = arith.constant 0 : index
    %13 = vector.load %arg1[%12, %c0_5, %c1, %c0_6] : memref<18x2x18x8xf32, #tpu.memory_space<vmem>>, vector<18x2x16x8xf32>
    %14 = vector.extract_strided_slice %13 {offsets = [0, 0, 0, 0], sizes = [16, 2, 16, 8], strides = [1, 1, 1, 1]} : vector<18x2x16x8xf32> to vector<16x2x16x8xf32>
    %15 = vector.extract_strided_slice %13 {offsets = [1, 0, 0, 0], sizes = [16, 2, 16, 8], strides = [1, 1, 1, 1]} : vector<18x2x16x8xf32> to vector<16x2x16x8xf32>
    %16 = vector.extract_strided_slice %13 {offsets = [2, 0, 0, 0], sizes = [16, 2, 16, 8], strides = [1, 1, 1, 1]} : vector<18x2x16x8xf32> to vector<16x2x16x8xf32>
    %17 = tpu.concatenate %14, %15, %16 in 3 : vector<16x2x16x8xf32>, vector<16x2x16x8xf32>, vector<16x2x16x8xf32> -> vector<16x2x16x24xf32>
    %18 = vector.shape_cast %17 : vector<16x2x16x24xf32> to vector<512x24xf32>
    %c1_7 = arith.constant 1 : index
    %c0_8 = arith.constant 0 : index
    %c0_9 = arith.constant 0 : index
    %19 = vector.load %arg2[%c1_7, %c0_8, %c0_9] : memref<3x32x24xf32, #tpu.memory_space<vmem>>, vector<1x32x24xf32>
    %20 = vector.shape_cast %19 : vector<1x32x24xf32> to vector<32x24xf32>
    %cst_10 = arith.constant dense<0.000000e+00> : vector<32x512xf32>
    %21 = tpu.matmul %20, %18, %cst_10 {dimension_numbers = #tpu.dot_dimension_numbers<[1], [1], [0], [0], [0, 0, 1, 0], [], []>} : vector<32x24xf32>, vector<512x24xf32>, vector<32x512xf32> -> vector<32x512xf32>
    %22 = arith.addf %11, %21 : vector<32x512xf32>
    %23 = arith.index_cast %1 : i32 to index
    %c0_11 = arith.constant 0 : index
    %c2 = arith.constant 2 : index
    %c0_12 = arith.constant 0 : index
    %24 = vector.load %arg1[%23, %c0_11, %c2, %c0_12] : memref<18x2x18x8xf32, #tpu.memory_space<vmem>>, vector<18x2x16x8xf32>
    %25 = vector.extract_strided_slice %24 {offsets = [0, 0, 0, 0], sizes = [16, 2, 16, 8], strides = [1, 1, 1, 1]} : vector<18x2x16x8xf32> to vector<16x2x16x8xf32>
    %26 = vector.extract_strided_slice %24 {offsets = [1, 0, 0, 0], sizes = [16, 2, 16, 8], strides = [1, 1, 1, 1]} : vector<18x2x16x8xf32> to vector<16x2x16x8xf32>
    %27 = vector.extract_strided_slice %24 {offsets = [2, 0, 0, 0], sizes = [16, 2, 16, 8], strides = [1, 1, 1, 1]} : vector<18x2x16x8xf32> to vector<16x2x16x8xf32>
    %28 = tpu.concatenate %25, %26, %27 in 3 : vector<16x2x16x8xf32>, vector<16x2x16x8xf32>, vector<16x2x16x8xf32> -> vector<16x2x16x24xf32>
    %29 = vector.shape_cast %28 : vector<16x2x16x24xf32> to vector<512x24xf32>
    %c2_13 = arith.constant 2 : index
    %c0_14 = arith.constant 0 : index
    %c0_15 = arith.constant 0 : index
    %30 = vector.load %arg2[%c2_13, %c0_14, %c0_15] : memref<3x32x24xf32, #tpu.memory_space<vmem>>, vector<1x32x24xf32>
    %31 = vector.shape_cast %30 : vector<1x32x24xf32> to vector<32x24xf32>
    %cst_16 = arith.constant dense<0.000000e+00> : vector<32x512xf32>
    %32 = tpu.matmul %31, %29, %cst_16 {dimension_numbers = #tpu.dot_dimension_numbers<[1], [1], [0], [0], [0, 0, 1, 0], [], []>} : vector<32x24xf32>, vector<512x24xf32>, vector<32x512xf32> -> vector<32x512xf32>
    %33 = arith.addf %22, %32 : vector<32x512xf32>
    %c0_17 = arith.constant 0 : index
    %c0_18 = arith.constant 0 : index
    %34 = vector.load %arg3[%c0_17, %c0_18] : memref<32x1xf32, #tpu.memory_space<vmem>>, vector<32x1xf32>
    %35 = vector.broadcast %34 : vector<32x1xf32> to vector<32x512xf32>
    %36 = arith.addf %33, %35 : vector<32x512xf32>
    %c0_19 = arith.constant 0 : index
    %37 = memref.load %arg4[%c0_19] : memref<1xf32, #tpu.memory_space<smem>>
    %cst_20 = arith.constant 0.000000e+00 : f32
    %38 = vector.broadcast %cst_20 : f32 to vector<32x512xf32>
    %39 = arith.cmpf oge, %36, %38 : vector<32x512xf32>
    %40 = vector.broadcast %37 : f32 to vector<32x512xf32>
    %41 = arith.mulf %40, %36 : vector<32x512xf32>
    %42 = arith.select %39, %36, %41 : vector<32x512xi1>, vector<32x512xf32>
    %c0_21 = arith.constant 0 : index
    %c0_22 = arith.constant 0 : index
    %43 = vector.load %arg5[%c0_21, %c0_22] : memref<32x512xf32, #tpu.memory_space<vmem>>, vector<32x512xf32>
    tpu.vector_store %arg5[%c0_21, %c0_22], %42 {strides = array<i32>} : memref<32x512xf32, #tpu.memory_space<vmem>>, vector<32x512xf32>,
    return
  }
  func.func @transform_0(%arg0: i32) -> (i32, i32, i32, i32) {
    %c0_i32 = arith.constant 0 : i32
    %c0_i32_0 = arith.constant 0 : i32
    %c0_i32_1 = arith.constant 0 : i32
    %c0_i32_2 = arith.constant 0 : i32
    %c0_i32_3 = arith.constant 0 : i32
    return %c0_i32, %c0_i32_0, %c0_i32_1, %c0_i32_2 : i32, i32, i32, i32
  }
  func.func @transform_1(%arg0: i32) -> (i32, i32, i32) {
    %c0_i32 = arith.constant 0 : i32
    %c0_i32_0 = arith.constant 0 : i32
    %c0_i32_1 = arith.constant 0 : i32
    %c0_i32_2 = arith.constant 0 : i32
    return %c0_i32, %c0_i32_0, %c0_i32_1 : i32, i32, i32
  }
  func.func @transform_2(%arg0: i32) -> (i32, i32) {
    %c0_i32 = arith.constant 0 : i32
    %c0_i32_0 = arith.constant 0 : i32
    %c0_i32_1 = arith.constant 0 : i32
    return %c0_i32, %c0_i32_0 : i32, i32
  }
  func.func @transform_3(%arg0: i32) -> i32 {
    %c0_i32 = arith.constant 0 : i32
    %c0_i32_0 = arith.constant 0 : i32
    return %c0_i32 : i32
  }
  func.func @transform_4(%arg0: i32) -> (i32, i32) {
    %c0_i32 = arith.constant 0 : i32
    %c0_i32_0 = arith.constant 0 : i32
    return %c0_i32, %arg0 : i32, i32
  }
}

</mosaic_0001>

<llo_original>
// kernel: tpu_custom_call.1
$region0: #{tpu_custom_call.1}
  #allocation0 [shape = 'u32[]', space=smem, size = 0x4, offset = 0x4, fixed_abs, tag = 'smem constant byte address 0x4 - core index']
  #allocation1 [shape = 'u32[144,128]{1,0:T(1,128)}', space=vmem, size = 0x12000, scoped, tag = 'internal scratch']
  #allocation2 [shape = 'f32[1]{0:T(128)S(6)}', space=smem, size = 0x200, scoped, tag = 'scoped memory for tpu_custom_call.1']
  %s0 = inlined_call_operand.vmem [shape: f32[18,2,18,8], index: 0, kind: input, shape index: {}]
  %s1 = inlined_call_operand.vmem [shape: f32[3,32,24], index: 1, kind: input, shape index: {}]
  %s2 = inlined_call_operand.vmem [shape: f32[32,1], index: 2, kind: input, shape index: {}]
  %s3 = inlined_call_operand.<no memory space> [shape: f32[1], index: 3, kind: input, shape index: {}]
  %s4 = inlined_call_operand.hbm [shape: f32[32,512], index: 4, kind: output, shape index: {}]
  %s5 = sld [smem:[#allocation0]]
  $region26: #{tpu_custom_call.1} parent=0
    _
  %s7 = ssub.s32 1, %s5
  %s8 = scalar_select 0, %s7, %s5
  %9 = sst [smem:[#allocation2]] %s3
  $region1: #{tpu_custom_call.1} parent=0
    #allocation3 [shape = 'u8[65536]{0}', space=vmem, size = 0x10000, scoped, tag = 'output window, operand 0, single buffered']
    #allocation4 [shape = 's32[1]{0}', space=sflag, size = 0x4, scoped, tag = 'scoped memory for tpu_custom_call.1']
    %10 = vsyncpa [#allocation4], 0
    // Predicated region
    $region2: #{tpu_custom_call.1} parent=1 // pred_check
      _
    $region3: #{tpu_custom_call.1} parent=1 // pred_check_branch
      %12 = sbr.rel (0) target = $region5
    $region4: #{tpu_custom_call.1} parent=1 // pred_region
      _
    $region5: #{tpu_custom_call.1} parent=1 // pred_fallthru
      _
    // Predicated region
    $region6: #{tpu_custom_call.1} parent=1 // pred_check
      _
    $region7: #{tpu_custom_call.1} parent=1 // pred_check_branch
      %14 = sbr.rel (0) target = $region9
    $region8: #{tpu_custom_call.1} parent=1 // pred_region
      _
    $region9: #{tpu_custom_call.1} parent=1 // pred_fallthru
      _
    // Predicated region
    $region10: #{tpu_custom_call.1} parent=1 // pred_check
      _
    $region11: #{tpu_custom_call.1} parent=1 // pred_check_branch
      %16 = sbr.rel (0) target = $region13
    $region12: #{tpu_custom_call.1} parent=1 // pred_region
      _
    $region13: #{tpu_custom_call.1} parent=1 // pred_fallthru
      _
    // Predicated region
    $region14: #{tpu_custom_call.1} parent=1 // pred_check
      _
    $region15: #{tpu_custom_call.1} parent=1 // pred_check_branch
      %18 = sbr.rel (0) target = $region17
    $region16: #{tpu_custom_call.1} parent=1 // pred_region
      _
    $region17: #{tpu_custom_call.1} parent=1 // pred_fallthru
      _
    %s19 = smul.u32 0, 16
    %s20 = smul.u32 %s19, 48
    %s21 = scalar_lea.vmem %s0, %s20
    %v22 = vld [vmem:[%s21] sm:$0xff]
    %v23 = vld [vmem:[%s21 + $0x8] sm:$0xff]
    %v24 = vld [vmem:[%s21 + $0x18] sm:$0xff]
    %v25 = vld [vmem:[%s21 + $0x20] sm:$0xff]
    %v26 = vld [vmem:[%s21 + $0x30] sm:$0xff]
    %v27 = vld [vmem:[%s21 + $0x38] sm:$0xff]
    %v28 = vld [vmem:[%s21 + $0x48] sm:$0xff]
    %v29 = vld [vmem:[%s21 + $0x50] sm:$0xff]
    %v30 = vld [vmem:[%s21 + $0x60] sm:$0xff]
    %v31 = vld [vmem:[%s21 + $0x68] sm:$0xff]
    %v32 = vld [vmem:[%s21 + $0x78] sm:$0xff]
    %v33 = vld [vmem:[%s21 + $0x80] sm:$0xff]
    %v34 = vld [vmem:[%s21 + $0x90] sm:$0xff]
    %v35 = vld [vmem:[%s21 + $0x98] sm:$0xff]
    %v36 = vld [vmem:[%s21 + $0xa8] sm:$0xff]
    %v37 = vld [vmem:[%s21 + $0xb0] sm:$0xff]
    %v38 = vld [vmem:[%s21 + $0xc0] sm:$0xff]
    %v39 = vld [vmem:[%s21 + $0xc8] sm:$0xff]
    %v40 = vld [vmem:[%s21 + $0xd8] sm:$0xff]
    %v41 = vld [vmem:[%s21 + $0xe0] sm:$0xff]
    %v42 = vld [vmem:[%s21 + $0xf0] sm:$0xff]
    %v43 = vld [vmem:[%s21 + $0xf8] sm:$0xff]
    %v44 = vld [vmem:[%s21 + $0x108] sm:$0xff]
    %v45 = vld [vmem:[%s21 + $0x110] sm:$0xff]
    %v46 = vld [vmem:[%s21 + $0x120] sm:$0xff]
    %v47 = vld [vmem:[%s21 + $0x128] sm:$0xff]
    %v48 = vld [vmem:[%s21 + $0x138] sm:$0xff]
    %v49 = vld [vmem:[%s21 + $0x140] sm:$0xff]
    %v50 = vld [vmem:[%s21 + $0x150] sm:$0xff]
    %v51 = vld [vmem:[%s21 + $0x158] sm:$0xff]
    %v52 = vld [vmem:[%s21 + $0x168] sm:$0xff]
    %v53 = vld [vmem:[%s21 + $0x170] sm:$0xff]
    %v54 = vld [vmem:[%s21 + $0x180] sm:$0xff]
    %v55 = vld [vmem:[%s21 + $0x188] sm:$0xff]
    %v56 = vld [vmem:[%s21 + $0x198] sm:$0xff]
    %v57 = vld [vmem:[%s21 + $0x1a0] sm:$0xff]
    %v58 = vld [vmem:[%s21 + $0x1b0] sm:$0xff]
    %v59 = vld [vmem:[%s21 + $0x1b8] sm:$0xff]
    %v60 = vld [vmem:[%s21 + $0x1c8] sm:$0xff]
    %v61 = vld [vmem:[%s21 + $0x1d0] sm:$0xff]
    %v62 = vld [vmem:[%s21 + $0x1e0] sm:$0xff]
    %v63 = vld [vmem:[%s21 + $0x1e8] sm:$0xff]
    %v64 = vld [vmem:[%s21 + $0x1f8] sm:$0xff]
    %v65 = vld [vmem:[%s21 + $0x200] sm:$0xff]
    %v66 = vld [vmem:[%s21 + $0x210] sm:$0xff]
    %v67 = vld [vmem:[%s21 + $0x218] sm:$0xff]
    %v68 = vld [vmem:[%s21 + $0x228] sm:$0xff]
    %v69 = vld [vmem:[%s21 + $0x230] sm:$0xff]
    %v70 = vld [vmem:[%s21 + $0x240] sm:$0xff]
    %v71 = vld [vmem:[%s21 + $0x248] sm:$0xff]
    %v72 = vld [vmem:[%s21 + $0x258] sm:$0xff]
    %v73 = vld [vmem:[%s21 + $0x260] sm:$0xff]
    %v74 = vld [vmem:[%s21 + $0x270] sm:$0xff]
    %v75 = vld [vmem:[%s21 + $0x278] sm:$0xff]
    %v76 = vld [vmem:[%s21 + $0x288] sm:$0xff]
    %v77 = vld [vmem:[%s21 + $0x290] sm:$0xff]
    %v78 = vld [vmem:[%s21 + $0x2a0] sm:$0xff]
    %v79 = vld [vmem:[%s21 + $0x2a8] sm:$0xff]
    %v80 = vld [vmem:[%s21 + $0x2b8] sm:$0xff]
    %v81 = vld [vmem:[%s21 + $0x2c0] sm:$0xff]
    %v82 = vld [vmem:[%s21 + $0x2d0] sm:$0xff]
    %v83 = vld [vmem:[%s21 + $0x2d8] sm:$0xff]
    %v84 = vld [vmem:[%s21 + $0x2e8] sm:$0xff]
    %v85 = vld [vmem:[%s21 + $0x2f0] sm:$0xff]
    %v86 = vld [vmem:[%s21 + $0x300] sm:$0xff]
    %v87 = vld [vmem:[%s21 + $0x308] sm:$0xff]
    %v88 = vld [vmem:[%s21 + $0x318] sm:$0xff]
    %v89 = vld [vmem:[%s21 + $0x320] sm:$0xff]
    %v90 = vld [vmem:[%s21 + $0x330] sm:$0xff]
    %v91 = vld [vmem:[%s21 + $0x338] sm:$0xff]
    %v92 = vld [vmem:[%s21 + $0x348] sm:$0xff]
    %v93 = vld [vmem:[%s21 + $0x350] sm:$0xff]
    %158 = vrot.lane.b32.xlu0 %v26, 8
    %v159 = vpop.permute.xlu0 %158
    %160 = vrot.lane.b32.xlu0 %v27, 8
    %v161 = vpop.permute.xlu0 %160
    %162 = vrot.lane.b32.xlu0 %v28, 8
    %v163 = vpop.permute.xlu0 %162
    %164 = vrot.lane.b32.xlu0 %v29, 8
    %v165 = vpop.permute.xlu0 %164
    %166 = vrot.lane.b32.xlu0 %v30, 8
    %v167 = vpop.permute.xlu0 %166
    %168 = vrot.lane.b32.xlu0 %v31, 8
    %v169 = vpop.permute.xlu0 %168
    %170 = vrot.lane.b32.xlu0 %v32, 8
    %v171 = vpop.permute.xlu0 %170
    %172 = vrot.lane.b32.xlu0 %v33, 8
    %v173 = vpop.permute.xlu0 %172
    %174 = vrot.lane.b32.xlu0 %v34, 8
    %v175 = vpop.permute.xlu0 %174
    %176 = vrot.lane.b32.xlu0 %v35, 8
    %v177 = vpop.permute.xlu0 %176
    %178 = vrot.lane.b32.xlu0 %v36, 8
    %v179 = vpop.permute.xlu0 %178
    %180 = vrot.lane.b32.xlu0 %v37, 8
    %v181 = vpop.permute.xlu0 %180
    %182 = vrot.lane.b32.xlu0 %v38, 8
    %v183 = vpop.permute.xlu0 %182
    %184 = vrot.lane.b32.xlu0 %v39, 8
    %v185 = vpop.permute.xlu0 %184
    %186 = vrot.lane.b32.xlu0 %v40, 8
    %v187 = vpop.permute.xlu0 %186
    %188 = vrot.lane.b32.xlu0 %v41, 8
    %v189 = vpop.permute.xlu0 %188
    %190 = vrot.lane.b32.xlu0 %v42, 8
    %v191 = vpop.permute.xlu0 %190
    %192 = vrot.lane.b32.xlu0 %v43, 8
    %v193 = vpop.permute.xlu0 %192
    %194 = vrot.lane.b32.xlu0 %v44, 8
    %v195 = vpop.permute.xlu0 %194
    %196 = vrot.lane.b32.xlu0 %v45, 8
    %v197 = vpop.permute.xlu0 %196
    %198 = vrot.lane.b32.xlu0 %v46, 8
    %v199 = vpop.permute.xlu0 %198
    %200 = vrot.lane.b32.xlu0 %v47, 8
    %v201 = vpop.permute.xlu0 %200
    %202 = vrot.lane.b32.xlu0 %v48, 8
    %v203 = vpop.permute.xlu0 %202
    %204 = vrot.lane.b32.xlu0 %v49, 8
    %v205 = vpop.permute.xlu0 %204
    %206 = vrot.lane.b32.xlu0 %v50, 8
    %v207 = vpop.permute.xlu0 %206
    %208 = vrot.lane.b32.xlu0 %v51, 8
    %v209 = vpop.permute.xlu0 %208
    %210 = vrot.lane.b32.xlu0 %v52, 8
    %v211 = vpop.permute.xlu0 %210
    %212 = vrot.lane.b32.xlu0 %v53, 8
    %v213 = vpop.permute.xlu0 %212
    %214 = vrot.lane.b32.xlu0 %v54, 8
    %v215 = vpop.permute.xlu0 %214
    %216 = vrot.lane.b32.xlu0 %v55, 8
    %v217 = vpop.permute.xlu0 %216
    %218 = vrot.lane.b32.xlu0 %v56, 8
    %v219 = vpop.permute.xlu0 %218
    %220 = vrot.lane.b32.xlu0 %v57, 8
    %v221 = vpop.permute.xlu0 %220
    %222 = vrot.lane.b32.xlu0 %v58, 8
    %v223 = vpop.permute.xlu0 %222
    %224 = vrot.lane.b32.xlu0 %v59, 8
    %v225 = vpop.permute.xlu0 %224
    %226 = vrot.lane.b32.xlu0 %v60, 8
    %v227 = vpop.permute.xlu0 %226
    %228 = vrot.lane.b32.xlu0 %v61, 8
    %v229 = vpop.permute.xlu0 %228
    %230 = vrot.lane.b32.xlu0 %v62, 8
    %v231 = vpop.permute.xlu0 %230
    %232 = vrot.lane.b32.xlu0 %v63, 8
    %v233 = vpop.permute.xlu0 %232
    %234 = vrot.lane.b32.xlu0 %v64, 8
    %v235 = vpop.permute.xlu0 %234
    %236 = vrot.lane.b32.xlu0 %v65, 8
    %v237 = vpop.permute.xlu0 %236
    %238 = vrot.lane.b32.xlu0 %v66, 8
    %v239 = vpop.permute.xlu0 %238
    %240 = vrot.lane.b32.xlu0 %v67, 8
    %v241 = vpop.permute.xlu0 %240
    %242 = vrot.lane.b32.xlu0 %v68, 8
    %v243 = vpop.permute.xlu0 %242
    %244 = vrot.lane.b32.xlu0 %v69, 8
    %v245 = vpop.permute.xlu0 %244
    %246 = vrot.lane.b32.xlu0 %v70, 8
    %v247 = vpop.permute.xlu0 %246
    %248 = vrot.lane.b32.xlu0 %v71, 8
    %v249 = vpop.permute.xlu0 %248
    %250 = vrot.lane.b32.xlu0 %v72, 8
    %v251 = vpop.permute.xlu0 %250
    %252 = vrot.lane.b32.xlu0 %v73, 8
    %v253 = vpop.permute.xlu0 %252
    %254 = vrot.lane.b32.xlu0 %v74, 8
    %v255 = vpop.permute.xlu0 %254
    %256 = vrot.lane.b32.xlu0 %v75, 8
    %v257 = vpop.permute.xlu0 %256
    %258 = vrot.lane.b32.xlu0 %v76, 8
    %v259 = vpop.permute.xlu0 %258
    %260 = vrot.lane.b32.xlu0 %v77, 8
    %v261 = vpop.permute.xlu0 %260
    %262 = vrot.lane.b32.xlu0 %v78, 8
    %v263 = vpop.permute.xlu0 %262
    %264 = vrot.lane.b32.xlu0 %v79, 8
    %v265 = vpop.permute.xlu0 %264
    %266 = vrot.lane.b32.xlu0 %v80, 8
    %v267 = vpop.permute.xlu0 %266
    %268 = vrot.lane.b32.xlu0 %v81, 8
    %v269 = vpop.permute.xlu0 %268
    %270 = vrot.lane.b32.xlu0 %v82, 8
    %v271 = vpop.permute.xlu0 %270
    %272 = vrot.lane.b32.xlu0 %v83, 8
    %v273 = vpop.permute.xlu0 %272
    %274 = vrot.lane.b32.xlu0 %v84, 8
    %v275 = vpop.permute.xlu0 %274
    %276 = vrot.lane.b32.xlu0 %v85, 8
    %v277 = vpop.permute.xlu0 %276
    %278 = vrot.lane.b32.xlu0 %v86, 8
    %v279 = vpop.permute.xlu0 %278
    %280 = vrot.lane.b32.xlu0 %v87, 8
    %v281 = vpop.permute.xlu0 %280
    %282 = vrot.lane.b32.xlu0 %v88, 8
    %v283 = vpop.permute.xlu0 %282
    %284 = vrot.lane.b32.xlu0 %v89, 8
    %v285 = vpop.permute.xlu0 %284
    %354 = vrot.lane.b32.xlu0 %v30, 16
    %v355 = vpop.permute.xlu0 %354
    %356 = vrot.lane.b32.xlu0 %v31, 16
    %v357 = vpop.permute.xlu0 %356
    %358 = vrot.lane.b32.xlu0 %v32, 16
    %v359 = vpop.permute.xlu0 %358
    %360 = vrot.lane.b32.xlu0 %v33, 16
    %v361 = vpop.permute.xlu0 %360
    %362 = vrot.lane.b32.xlu0 %v34, 16
    %v363 = vpop.permute.xlu0 %362
    %364 = vrot.lane.b32.xlu0 %v35, 16
    %v365 = vpop.permute.xlu0 %364
    %366 = vrot.lane.b32.xlu0 %v36, 16
    %v367 = vpop.permute.xlu0 %366
    %368 = vrot.lane.b32.xlu0 %v37, 16
    %v369 = vpop.permute.xlu0 %368
    %370 = vrot.lane.b32.xlu0 %v38, 16
    %v371 = vpop.permute.xlu0 %370
    %372 = vrot.lane.b32.xlu0 %v39, 16
    %v373 = vpop.permute.xlu0 %372
    %374 = vrot.lane.b32.xlu0 %v40, 16
    %v375 = vpop.permute.xlu0 %374
    %376 = vrot.lane.b32.xlu0 %v41, 16
    %v377 = vpop.permute.xlu0 %376
    %378 = vrot.lane.b32.xlu0 %v42, 16
    %v379 = vpop.permute.xlu0 %378
    %380 = vrot.lane.b32.xlu0 %v43, 16
    %v381 = vpop.permute.xlu0 %380
    %382 = vrot.lane.b32.xlu0 %v44, 16
    %v383 = vpop.permute.xlu0 %382
    %384 = vrot.lane.b32.xlu0 %v45, 16
    %v385 = vpop.permute.xlu0 %384
    %386 = vrot.lane.b32.xlu0 %v46, 16
    %v387 = vpop.permute.xlu0 %386
    %388 = vrot.lane.b32.xlu0 %v47, 16
    %v389 = vpop.permute.xlu0 %388
    %390 = vrot.lane.b32.xlu0 %v48, 16
    %v391 = vpop.permute.xlu0 %390
    %392 = vrot.lane.b32.xlu0 %v49, 16
    %v393 = vpop.permute.xlu0 %392
    %394 = vrot.lane.b32.xlu0 %v50, 16
    %v395 = vpop.permute.xlu0 %394
    %396 = vrot.lane.b32.xlu0 %v51, 16
    %v397 = vpop.permute.xlu0 %396
    %398 = vrot.lane.b32.xlu0 %v52, 16
    %v399 = vpop.permute.xlu0 %398
    %400 = vrot.lane.b32.xlu0 %v53, 16
    %v401 = vpop.permute.xlu0 %400
    %402 = vrot.lane.b32.xlu0 %v54, 16
    %v403 = vpop.permute.xlu0 %402
    %404 = vrot.lane.b32.xlu0 %v55, 16
    %v405 = vpop.permute.xlu0 %404
    %406 = vrot.lane.b32.xlu0 %v56, 16
    %v407 = vpop.permute.xlu0 %406
    %408 = vrot.lane.b32.xlu0 %v57, 16
    %v409 = vpop.permute.xlu0 %408
    %410 = vrot.lane.b32.xlu0 %v58, 16
    %v411 = vpop.permute.xlu0 %410
    %412 = vrot.lane.b32.xlu0 %v59, 16
    %v413 = vpop.permute.xlu0 %412
    %414 = vrot.lane.b32.xlu0 %v60, 16
    %v415 = vpop.permute.xlu0 %414
    %416 = vrot.lane.b32.xlu0 %v61, 16
    %v417 = vpop.permute.xlu0 %416
    %418 = vrot.lane.b32.xlu0 %v62, 16
    %v419 = vpop.permute.xlu0 %418
    %420 = vrot.lane.b32.xlu0 %v63, 16
    %v421 = vpop.permute.xlu0 %420
    %422 = vrot.lane.b32.xlu0 %v64, 16
    %v423 = vpop.permute.xlu0 %422
    %424 = vrot.lane.b32.xlu0 %v65, 16
    %v425 = vpop.permute.xlu0 %424
    %426 = vrot.lane.b32.xlu0 %v66, 16
    %v427 = vpop.permute.xlu0 %426
    %428 = vrot.lane.b32.xlu0 %v67, 16
    %v429 = vpop.permute.xlu0 %428
    %430 = vrot.lane.b32.xlu0 %v68, 16
    %v431 = vpop.permute.xlu0 %430
    %432 = vrot.lane.b32.xlu0 %v69, 16
    %v433 = vpop.permute.xlu0 %432
    %434 = vrot.lane.b32.xlu0 %v70, 16
    %v435 = vpop.permute.xlu0 %434
    %436 = vrot.lane.b32.xlu0 %v71, 16
    %v437 = vpop.permute.xlu0 %436
    %438 = vrot.lane.b32.xlu0 %v72, 16
    %v439 = vpop.permute.xlu0 %438
    %440 = vrot.lane.b32.xlu0 %v73, 16
    %v441 = vpop.permute.xlu0 %440
    %442 = vrot.lane.b32.xlu0 %v74, 16
    %v443 = vpop.permute.xlu0 %442
    %444 = vrot.lane.b32.xlu0 %v75, 16
    %v445 = vpop.permute.xlu0 %444
    %446 = vrot.lane.b32.xlu0 %v76, 16
    %v447 = vpop.permute.xlu0 %446
    %448 = vrot.lane.b32.xlu0 %v77, 16
    %v449 = vpop.permute.xlu0 %448
    %450 = vrot.lane.b32.xlu0 %v78, 16
    %v451 = vpop.permute.xlu0 %450
    %452 = vrot.lane.b32.xlu0 %v79, 16
    %v453 = vpop.permute.xlu0 %452
    %454 = vrot.lane.b32.xlu0 %v80, 16
    %v455 = vpop.permute.xlu0 %454
    %456 = vrot.lane.b32.xlu0 %v81, 16
    %v457 = vpop.permute.xlu0 %456
    %458 = vrot.lane.b32.xlu0 %v82, 16
    %v459 = vpop.permute.xlu0 %458
    %460 = vrot.lane.b32.xlu0 %v83, 16
    %v461 = vpop.permute.xlu0 %460
    %462 = vrot.lane.b32.xlu0 %v84, 16
    %v463 = vpop.permute.xlu0 %462
    %464 = vrot.lane.b32.xlu0 %v85, 16
    %v465 = vpop.permute.xlu0 %464
    %466 = vrot.lane.b32.xlu0 %v86, 16
    %v467 = vpop.permute.xlu0 %466
    %468 = vrot.lane.b32.xlu0 %v87, 16
    %v469 = vpop.permute.xlu0 %468
    %470 = vrot.lane.b32.xlu0 %v88, 16
    %v471 = vpop.permute.xlu0 %470
    %472 = vrot.lane.b32.xlu0 %v89, 16
    %v473 = vpop.permute.xlu0 %472
    %474 = vrot.lane.b32.xlu0 %v90, 16
    %v475 = vpop.permute.xlu0 %474
    %476 = vrot.lane.b32.xlu0 %v91, 16
    %v477 = vpop.permute.xlu0 %476
    %478 = vrot.lane.b32.xlu0 %v92, 16
    %v479 = vpop.permute.xlu0 %478
    %480 = vrot.lane.b32.xlu0 %v93, 16
    %v481 = vpop.permute.xlu0 %480
    %vm546 = vcmask 64512
    %v547 = vsel %vm546, %v22, %v159
    %v548 = vsel %vm546, %v23, %v161
    %v549 = vsel %vm546, %v24, %v163
    %v550 = vsel %vm546, %v25, %v165
    %v551 = vsel %vm546, %v26, %v167
    %v552 = vsel %vm546, %v27, %v169
    %v553 = vsel %vm546, %v28, %v171
    %v554 = vsel %vm546, %v29, %v173
    %v555 = vsel %vm546, %v30, %v175
    %v556 = vsel %vm546, %v31, %v177
    %v557 = vsel %vm546, %v32, %v179
    %v558 = vsel %vm546, %v33, %v181
    %v559 = vsel %vm546, %v34, %v183
    %v560 = vsel %vm546, %v35, %v185
    %v561 = vsel %vm546, %v36, %v187
    %v562 = vsel %vm546, %v37, %v189
    %v563 = vsel %vm546, %v38, %v191
    %v564 = vsel %vm546, %v39, %v193
    %v565 = vsel %vm546, %v40, %v195
    %v566 = vsel %vm546, %v41, %v197
    %v567 = vsel %vm546, %v42, %v199
    %v568 = vsel %vm546, %v43, %v201
    %v569 = vsel %vm546, %v44, %v203
    %v570 = vsel %vm546, %v45, %v205
    %v571 = vsel %vm546, %v46, %v207
    %v572 = vsel %vm546, %v47, %v209
    %v573 = vsel %vm546, %v48, %v211
    %v574 = vsel %vm546, %v49, %v213
    %v575 = vsel %vm546, %v50, %v215
    %v576 = vsel %vm546, %v51, %v217
    %v577 = vsel %vm546, %v52, %v219
    %v578 = vsel %vm546, %v53, %v221
    %v579 = vsel %vm546, %v54, %v223
    %v580 = vsel %vm546, %v55, %v225
    %v581 = vsel %vm546, %v56, %v227
    %v582 = vsel %vm546, %v57, %v229
    %v583 = vsel %vm546, %v58, %v231
    %v584 = vsel %vm546, %v59, %v233
    %v585 = vsel %vm546, %v60, %v235
    %v586 = vsel %vm546, %v61, %v237
    %v587 = vsel %vm546, %v62, %v239
    %v588 = vsel %vm546, %v63, %v241
    %v589 = vsel %vm546, %v64, %v243
    %v590 = vsel %vm546, %v65, %v245
    %v591 = vsel %vm546, %v66, %v247
    %v592 = vsel %vm546, %v67, %v249
    %v593 = vsel %vm546, %v68, %v251
    %v594 = vsel %vm546, %v69, %v253
    %v595 = vsel %vm546, %v70, %v255
    %v596 = vsel %vm546, %v71, %v257
    %v597 = vsel %vm546, %v72, %v259
    %v598 = vsel %vm546, %v73, %v261
    %v599 = vsel %vm546, %v74, %v263
    %v600 = vsel %vm546, %v75, %v265
    %v601 = vsel %vm546, %v76, %v267
    %v602 = vsel %vm546, %v77, %v269
    %v603 = vsel %vm546, %v78, %v271
    %v604 = vsel %vm546, %v79, %v273
    %v605 = vsel %vm546, %v80, %v275
    %v606 = vsel %vm546, %v81, %v277
    %v607 = vsel %vm546, %v82, %v279
    %v608 = vsel %vm546, %v83, %v281
    %v609 = vsel %vm546, %v84, %v283
    %v610 = vsel %vm546, %v85, %v285
    %vm611 = vcmask 130048
    %v612 = vsel %vm611, %v547, %v355
    %v613 = vsel %vm611, %v548, %v357
    %v614 = vsel %vm611, %v549, %v359
    %v615 = vsel %vm611, %v550, %v361
    %v616 = vsel %vm611, %v551, %v363
    %v617 = vsel %vm611, %v552, %v365
    %v618 = vsel %vm611, %v553, %v367
    %v619 = vsel %vm611, %v554, %v369
    %v620 = vsel %vm611, %v555, %v371
    %v621 = vsel %vm611, %v556, %v373
    %v622 = vsel %vm611, %v557, %v375
    %v623 = vsel %vm611, %v558, %v377
    %v624 = vsel %vm611, %v559, %v379
    %v625 = vsel %vm611, %v560, %v381
    %v626 = vsel %vm611, %v561, %v383
    %v627 = vsel %vm611, %v562, %v385
    %v628 = vsel %vm611, %v563, %v387
    %v629 = vsel %vm611, %v564, %v389
    %v630 = vsel %vm611, %v565, %v391
    %v631 = vsel %vm611, %v566, %v393
    %v632 = vsel %vm611, %v567, %v395
    %v633 = vsel %vm611, %v568, %v397
    %v634 = vsel %vm611, %v569, %v399
    %v635 = vsel %vm611, %v570, %v401
    %v636 = vsel %vm611, %v571, %v403
    %v637 = vsel %vm611, %v572, %v405
    %v638 = vsel %vm611, %v573, %v407
    %v639 = vsel %vm611, %v574, %v409
    %v640 = vsel %vm611, %v575, %v411
    %v641 = vsel %vm611, %v576, %v413
    %v642 = vsel %vm611, %v577, %v415
    %v643 = vsel %vm611, %v578, %v417
    %v644 = vsel %vm611, %v579, %v419
    %v645 = vsel %vm611, %v580, %v421
    %v646 = vsel %vm611, %v581, %v423
    %v647 = vsel %vm611, %v582, %v425
    %v648 = vsel %vm611, %v583, %v427
    %v649 = vsel %vm611, %v584, %v429
    %v650 = vsel %vm611, %v585, %v431
    %v651 = vsel %vm611, %v586, %v433
    %v652 = vsel %vm611, %v587, %v435
    %v653 = vsel %vm611, %v588, %v437
    %v654 = vsel %vm611, %v589, %v439
    %v655 = vsel %vm611, %v590, %v441
    %v656 = vsel %vm611, %v591, %v443
    %v657 = vsel %vm611, %v592, %v445
    %v658 = vsel %vm611, %v593, %v447
    %v659 = vsel %vm611, %v594, %v449
    %v660 = vsel %vm611, %v595, %v451
    %v661 = vsel %vm611, %v596, %v453
    %v662 = vsel %vm611, %v597, %v455
    %v663 = vsel %vm611, %v598, %v457
    %v664 = vsel %vm611, %v599, %v459
    %v665 = vsel %vm611, %v600, %v461
    %v666 = vsel %vm611, %v601, %v463
    %v667 = vsel %vm611, %v602, %v465
    %v668 = vsel %vm611, %v603, %v467
    %v669 = vsel %vm611, %v604, %v469
    %v670 = vsel %vm611, %v605, %v471
    %v671 = vsel %vm611, %v606, %v473
    %v672 = vsel %vm611, %v607, %v475
    %v673 = vsel %vm611, %v608, %v477
    %v674 = vsel %vm611, %v609, %v479
    %v675 = vsel %vm611, %v610, %v481
    %v676 = vld [vmem:[%s1] sm:$0xff]
    %v677 = vld [vmem:[%s1 + $0x8] sm:$0xff]
    %v678 = vld [vmem:[%s1 + $0x10] sm:$0xff]
    %v679 = vld [vmem:[%s1 + $0x18] sm:$0xff]
    %v680 = vld [vmem:[%s21 + $0x1] sm:$0xff]
    %v681 = vld [vmem:[%s21 + $0x9] sm:$0xff]
    %v682 = vld [vmem:[%s21 + $0x19] sm:$0xff]
    %v683 = vld [vmem:[%s21 + $0x21] sm:$0xff]
    %v684 = vld [vmem:[%s21 + $0x31] sm:$0xff]
    %v685 = vld [vmem:[%s21 + $0x39] sm:$0xff]
    %v686 = vld [vmem:[%s21 + $0x49] sm:$0xff]
    %v687 = vld [vmem:[%s21 + $0x51] sm:$0xff]
    %v688 = vld [vmem:[%s21 + $0x61] sm:$0xff]
    %v689 = vld [vmem:[%s21 + $0x69] sm:$0xff]
    %v690 = vld [vmem:[%s21 + $0x79] sm:$0xff]
    %v691 = vld [vmem:[%s21 + $0x81] sm:$0xff]
    %v692 = vld [vmem:[%s21 + $0x91] sm:$0xff]
    %v693 = vld [vmem:[%s21 + $0x99] sm:$0xff]
    %v694 = vld [vmem:[%s21 + $0xa9] sm:$0xff]
    %v695 = vld [vmem:[%s21 + $0xb1] sm:$0xff]
    %v696 = vld [vmem:[%s21 + $0xc1] sm:$0xff]
    %v697 = vld [vmem:[%s21 + $0xc9] sm:$0xff]
    %v698 = vld [vmem:[%s21 + $0xd9] sm:$0xff]
    %v699 = vld [vmem:[%s21 + $0xe1] sm:$0xff]
    %v700 = vld [vmem:[%s21 + $0xf1] sm:$0xff]
    %v701 = vld [vmem:[%s21 + $0xf9] sm:$0xff]
    %v702 = vld [vmem:[%s21 + $0x109] sm:$0xff]
    %v703 = vld [vmem:[%s21 + $0x111] sm:$0xff]
    %v704 = vld [vmem:[%s21 + $0x121] sm:$0xff]
    %v705 = vld [vmem:[%s21 + $0x129] sm:$0xff]
    %v706 = vld [vmem:[%s21 + $0x139] sm:$0xff]
    %v707 = vld [vmem:[%s21 + $0x141] sm:$0xff]
    %v708 = vld [vmem:[%s21 + $0x151] sm:$0xff]
    %v709 = vld [vmem:[%s21 + $0x159] sm:$0xff]
    %v710 = vld [vmem:[%s21 + $0x169] sm:$0xff]
    %v711 = vld [vmem:[%s21 + $0x171] sm:$0xff]
    %v712 = vld [vmem:[%s21 + $0x181] sm:$0xff]
    %v713 = vld [vmem:[%s21 + $0x189] sm:$0xff]
    %v714 = vld [vmem:[%s21 + $0x199] sm:$0xff]
    %v715 = vld [vmem:[%s21 + $0x1a1] sm:$0xff]
    %v716 = vld [vmem:[%s21 + $0x1b1] sm:$0xff]
    %v717 = vld [vmem:[%s21 + $0x1b9] sm:$0xff]
    %v718 = vld [vmem:[%s21 + $0x1c9] sm:$0xff]
    %v719 = vld [vmem:[%s21 + $0x1d1] sm:$0xff]
    %v720 = vld [vmem:[%s21 + $0x1e1] sm:$0xff]
    %v721 = vld [vmem:[%s21 + $0x1e9] sm:$0xff]
    %v722 = vld [vmem:[%s21 + $0x1f9] sm:$0xff]
    %v723 = vld [vmem:[%s21 + $0x201] sm:$0xff]
    %v724 = vld [vmem:[%s21 + $0x211] sm:$0xff]
    %v725 = vld [vmem:[%s21 + $0x219] sm:$0xff]
    %v726 = vld [vmem:[%s21 + $0x229] sm:$0xff]
    %v727 = vld [vmem:[%s21 + $0x231] sm:$0xff]
    %v728 = vld [vmem:[%s21 + $0x241] sm:$0xff]
    %v729 = vld [vmem:[%s21 + $0x249] sm:$0xff]
    %v730 = vld [vmem:[%s21 + $0x259] sm:$0xff]
    %v731 = vld [vmem:[%s21 + $0x261] sm:$0xff]
    %v732 = vld [vmem:[%s21 + $0x271] sm:$0xff]
    %v733 = vld [vmem:[%s21 + $0x279] sm:$0xff]
    %v734 = vld [vmem:[%s21 + $0x289] sm:$0xff]
    %v735 = vld [vmem:[%s21 + $0x291] sm:$0xff]
    %v736 = vld [vmem:[%s21 + $0x2a1] sm:$0xff]
    %v737 = vld [vmem:[%s21 + $0x2a9] sm:$0xff]
    %v738 = vld [vmem:[%s21 + $0x2b9] sm:$0xff]
    %v739 = vld [vmem:[%s21 + $0x2c1] sm:$0xff]
    %v740 = vld [vmem:[%s21 + $0x2d1] sm:$0xff]
    %v741 = vld [vmem:[%s21 + $0x2d9] sm:$0xff]
    %v742 = vld [vmem:[%s21 + $0x2e9] sm:$0xff]
    %v743 = vld [vmem:[%s21 + $0x2f1] sm:$0xff]
    %v744 = vld [vmem:[%s21 + $0x301] sm:$0xff]
    %v745 = vld [vmem:[%s21 + $0x309] sm:$0xff]
    %v746 = vld [vmem:[%s21 + $0x319] sm:$0xff]
    %v747 = vld [vmem:[%s21 + $0x321] sm:$0xff]
    %v748 = vld [vmem:[%s21 + $0x331] sm:$0xff]
    %v749 = vld [vmem:[%s21 + $0x339] sm:$0xff]
    %v750 = vld [vmem:[%s21 + $0x349] sm:$0xff]
    %v751 = vld [vmem:[%s21 + $0x351] sm:$0xff]
    %816 = vrot.lane.b32.xlu0 %v684, 8
    %v817 = vpop.permute.xlu0 %816
    %818 = vrot.lane.b32.xlu0 %v685, 8
    %v819 = vpop.permute.xlu0 %818
    %820 = vrot.lane.b32.xlu0 %v686, 8
    %v821 = vpop.permute.xlu0 %820
    %822 = vrot.lane.b32.xlu0 %v687, 8
    %v823 = vpop.permute.xlu0 %822
    %824 = vrot.lane.b32.xlu0 %v688, 8
    %v825 = vpop.permute.xlu0 %824
    %826 = vrot.lane.b32.xlu0 %v689, 8
    %v827 = vpop.permute.xlu0 %826
    %828 = vrot.lane.b32.xlu0 %v690, 8
    %v829 = vpop.permute.xlu0 %828
    %830 = vrot.lane.b32.xlu0 %v691, 8
    %v831 = vpop.permute.xlu0 %830
    %832 = vrot.lane.b32.xlu0 %v692, 8
    %v833 = vpop.permute.xlu0 %832
    %834 = vrot.lane.b32.xlu0 %v693, 8
    %v835 = vpop.permute.xlu0 %834
    %836 = vrot.lane.b32.xlu0 %v694, 8
    %v837 = vpop.permute.xlu0 %836
    %838 = vrot.lane.b32.xlu0 %v695, 8
    %v839 = vpop.permute.xlu0 %838
    %840 = vrot.lane.b32.xlu0 %v696, 8
    %v841 = vpop.permute.xlu0 %840
    %842 = vrot.lane.b32.xlu0 %v697, 8
    %v843 = vpop.permute.xlu0 %842
    %844 = vrot.lane.b32.xlu0 %v698, 8
    %v845 = vpop.permute.xlu0 %844
    %846 = vrot.lane.b32.xlu0 %v699, 8
    %v847 = vpop.permute.xlu0 %846
    %848 = vrot.lane.b32.xlu0 %v700, 8
    %v849 = vpop.permute.xlu0 %848
    %850 = vrot.lane.b32.xlu0 %v701, 8
    %v851 = vpop.permute.xlu0 %850
    %852 = vrot.lane.b32.xlu0 %v702, 8
    %v853 = vpop.permute.xlu0 %852
    %854 = vrot.lane.b32.xlu0 %v703, 8
    %v855 = vpop.permute.xlu0 %854
    %856 = vrot.lane.b32.xlu0 %v704, 8
    %v857 = vpop.permute.xlu0 %856
    %858 = vrot.lane.b32.xlu0 %v705, 8
    %v859 = vpop.permute.xlu0 %858
    %860 = vrot.lane.b32.xlu0 %v706, 8
    %v861 = vpop.permute.xlu0 %860
    %862 = vrot.lane.b32.xlu0 %v707, 8
    %v863 = vpop.permute.xlu0 %862
    %864 = vrot.lane.b32.xlu0 %v708, 8
    %v865 = vpop.permute.xlu0 %864
    %866 = vrot.lane.b32.xlu0 %v709, 8
    %v867 = vpop.permute.xlu0 %866
    %868 = vrot.lane.b32.xlu0 %v710, 8
    %v869 = vpop.permute.xlu0 %868
    %870 = vrot.lane.b32.xlu0 %v711, 8
    %v871 = vpop.permute.xlu0 %870
    %872 = vrot.lane.b32.xlu0 %v712, 8
    %v873 = vpop.permute.xlu0 %872
    %874 = vrot.lane.b32.xlu0 %v713, 8
    %v875 = vpop.permute.xlu0 %874
    %876 = vrot.lane.b32.xlu0 %v714, 8
    %v877 = vpop.permute.xlu0 %876
    %878 = vrot.lane.b32.xlu0 %v715, 8
    %v879 = vpop.permute.xlu0 %878
    %880 = vrot.lane.b32.xlu0 %v716, 8
    %v881 = vpop.permute.xlu0 %880
    %882 = vrot.lane.b32.xlu0 %v717, 8
    %v883 = vpop.permute.xlu0 %882
    %884 = vrot.lane.b32.xlu0 %v718, 8
    %v885 = vpop.permute.xlu0 %884
    %886 = vrot.lane.b32.xlu0 %v719, 8
    %v887 = vpop.permute.xlu0 %886
    %888 = vrot.lane.b32.xlu0 %v720, 8
    %v889 = vpop.permute.xlu0 %888
    %890 = vrot.lane.b32.xlu0 %v721, 8
    %v891 = vpop.permute.xlu0 %890
    %892 = vrot.lane.b32.xlu0 %v722, 8
    %v893 = vpop.permute.xlu0 %892
    %894 = vrot.lane.b32.xlu0 %v723, 8
    %v895 = vpop.permute.xlu0 %894
    %896 = vrot.lane.b32.xlu0 %v724, 8
    %v897 = vpop.permute.xlu0 %896
    %898 = vrot.lane.b32.xlu0 %v725, 8
    %v899 = vpop.permute.xlu0 %898
    %900 = vrot.lane.b32.xlu0 %v726, 8
    %v901 = vpop.permute.xlu0 %900
    %902 = vrot.lane.b32.xlu0 %v727, 8
    %v903 = vpop.permute.xlu0 %902
    %904 = vrot.lane.b32.xlu0 %v728, 8
    %v905 = vpop.permute.xlu0 %904
    %906 = vrot.lane.b32.xlu0 %v729, 8
    %v907 = vpop.permute.xlu0 %906
    %908 = vrot.lane.b32.xlu0 %v730, 8
    %v909 = vpop.permute.xlu0 %908
    %910 = vrot.lane.b32.xlu0 %v731, 8
    %v911 = vpop.permute.xlu0 %910
    %912 = vrot.lane.b32.xlu0 %v732, 8
    %v913 = vpop.permute.xlu0 %912
    %914 = vrot.lane.b32.xlu0 %v733, 8
    %v915 = vpop.permute.xlu0 %914
    %916 = vrot.lane.b32.xlu0 %v734, 8
    %v917 = vpop.permute.xlu0 %916
    %918 = vrot.lane.b32.xlu0 %v735, 8
    %v919 = vpop.permute.xlu0 %918
    %920 = vrot.lane.b32.xlu0 %v736, 8
    %v921 = vpop.permute.xlu0 %920
    %922 = vrot.lane.b32.xlu0 %v737, 8
    %v923 = vpop.permute.xlu0 %922
    %924 = vrot.lane.b32.xlu0 %v738, 8
    %v925 = vpop.permute.xlu0 %924
    %926 = vrot.lane.b32.xlu0 %v739, 8
    %v927 = vpop.permute.xlu0 %926
    %928 = vrot.lane.b32.xlu0 %v740, 8
    %v929 = vpop.permute.xlu0 %928
    %930 = vrot.lane.b32.xlu0 %v741, 8
    %v931 = vpop.permute.xlu0 %930
    %932 = vrot.lane.b32.xlu0 %v742, 8
    %v933 = vpop.permute.xlu0 %932
    %934 = vrot.lane.b32.xlu0 %v743, 8
    %v935 = vpop.permute.xlu0 %934
    %936 = vrot.lane.b32.xlu0 %v744, 8
    %v937 = vpop.permute.xlu0 %936
    %938 = vrot.lane.b32.xlu0 %v745, 8
    %v939 = vpop.permute.xlu0 %938
    %940 = vrot.lane.b32.xlu0 %v746, 8
    %v941 = vpop.permute.xlu0 %940
    %942 = vrot.lane.b32.xlu0 %v747, 8
    %v943 = vpop.permute.xlu0 %942
    %1012 = vrot.lane.b32.xlu0 %v688, 16
    %v1013 = vpop.permute.xlu0 %1012
    %1014 = vrot.lane.b32.xlu0 %v689, 16
    %v1015 = vpop.permute.xlu0 %1014
    %1016 = vrot.lane.b32.xlu0 %v690, 16
    %v1017 = vpop.permute.xlu0 %1016
    %1018 = vrot.lane.b32.xlu0 %v691, 16
    %v1019 = vpop.permute.xlu0 %1018
    %1020 = vrot.lane.b32.xlu0 %v692, 16
    %v1021 = vpop.permute.xlu0 %1020
    %1022 = vrot.lane.b32.xlu0 %v693, 16
    %v1023 = vpop.permute.xlu0 %1022
    %1024 = vrot.lane.b32.xlu0 %v694, 16
    %v1025 = vpop.permute.xlu0 %1024
    %1026 = vrot.lane.b32.xlu0 %v695, 16
    %v1027 = vpop.permute.xlu0 %1026
    %1028 = vrot.lane.b32.xlu0 %v696, 16
    %v1029 = vpop.permute.xlu0 %1028
    %1030 = vrot.lane.b32.xlu0 %v697, 16
    %v1031 = vpop.permute.xlu0 %1030
    %1032 = vrot.lane.b32.xlu0 %v698, 16
    %v1033 = vpop.permute.xlu0 %1032
    %1034 = vrot.lane.b32.xlu0 %v699, 16
    %v1035 = vpop.permute.xlu0 %1034
    %1036 = vrot.lane.b32.xlu0 %v700, 16
    %v1037 = vpop.permute.xlu0 %1036
    %1038 = vrot.lane.b32.xlu0 %v701, 16
    %v1039 = vpop.permute.xlu0 %1038
    %1040 = vrot.lane.b32.xlu0 %v702, 16
    %v1041 = vpop.permute.xlu0 %1040
    %1042 = vrot.lane.b32.xlu0 %v703, 16
    %v1043 = vpop.permute.xlu0 %1042
    %1044 = vrot.lane.b32.xlu0 %v704, 16
    %v1045 = vpop.permute.xlu0 %1044
    %1046 = vrot.lane.b32.xlu0 %v705, 16
    %v1047 = vpop.permute.xlu0 %1046
    %1048 = vrot.lane.b32.xlu0 %v706, 16
    %v1049 = vpop.permute.xlu0 %1048
    %1050 = vrot.lane.b32.xlu0 %v707, 16
    %v1051 = vpop.permute.xlu0 %1050
    %1052 = vrot.lane.b32.xlu0 %v708, 16
    %v1053 = vpop.permute.xlu0 %1052
    %1054 = vrot.lane.b32.xlu0 %v709, 16
    %v1055 = vpop.permute.xlu0 %1054
    %1056 = vrot.lane.b32.xlu0 %v710, 16
    %v1057 = vpop.permute.xlu0 %1056
    %1058 = vrot.lane.b32.xlu0 %v711, 16
    %v1059 = vpop.permute.xlu0 %1058
    %1060 = vrot.lane.b32.xlu0 %v712, 16
    %v1061 = vpop.permute.xlu0 %1060
    %1062 = vrot.lane.b32.xlu0 %v713, 16
    %v1063 = vpop.permute.xlu0 %1062
    %1064 = vrot.lane.b32.xlu0 %v714, 16
    %v1065 = vpop.permute.xlu0 %1064
    %1066 = vrot.lane.b32.xlu0 %v715, 16
    %v1067 = vpop.permute.xlu0 %1066
    %1068 = vrot.lane.b32.xlu0 %v716, 16
    %v1069 = vpop.permute.xlu0 %1068
    %1070 = vrot.lane.b32.xlu0 %v717, 16
    %v1071 = vpop.permute.xlu0 %1070
    %1072 = vrot.lane.b32.xlu0 %v718, 16
    %v1073 = vpop.permute.xlu0 %1072
    %1074 = vrot.lane.b32.xlu0 %v719, 16
    %v1075 = vpop.permute.xlu0 %1074
    %1076 = vrot.lane.b32.xlu0 %v720, 16
    %v1077 = vpop.permute.xlu0 %1076
    %1078 = vrot.lane.b32.xlu0 %v721, 16
    %v1079 = vpop.permute.xlu0 %1078
    %1080 = vrot.lane.b32.xlu0 %v722, 16
    %v1081 = vpop.permute.xlu0 %1080
    %1082 = vrot.lane.b32.xlu0 %v723, 16
    %v1083 = vpop.permute.xlu0 %1082
    %1084 = vrot.lane.b32.xlu0 %v724, 16
    %v1085 = vpop.permute.xlu0 %1084
    %1086 = vrot.lane.b32.xlu0 %v725, 16
    %v1087 = vpop.permute.xlu0 %1086
    %1088 = vrot.lane.b32.xlu0 %v726, 16
    %v1089 = vpop.permute.xlu0 %1088
    %1090 = vrot.lane.b32.xlu0 %v727, 16
    %v1091 = vpop.permute.xlu0 %1090
    %1092 = vrot.lane.b32.xlu0 %v728, 16
    %v1093 = vpop.permute.xlu0 %1092
    %1094 = vrot.lane.b32.xlu0 %v729, 16
    %v1095 = vpop.permute.xlu0 %1094
    %1096 = vrot.lane.b32.xlu0 %v730, 16
    %v1097 = vpop.permute.xlu0 %1096
    %1098 = vrot.lane.b32.xlu0 %v731, 16
    %v1099 = vpop.permute.xlu0 %1098
    %1100 = vrot.lane.b32.xlu0 %v732, 16
    %v1101 = vpop.permute.xlu0 %1100
    %1102 = vrot.lane.b32.xlu0 %v733, 16
    %v1103 = vpop.permute.xlu0 %1102
    %1104 = vrot.lane.b32.xlu0 %v734, 16
    %v1105 = vpop.permute.xlu0 %1104
    %1106 = vrot.lane.b32.xlu0 %v735, 16
    %v1107 = vpop.permute.xlu0 %1106
    %1108 = vrot.lane.b32.xlu0 %v736, 16
    %v1109 = vpop.permute.xlu0 %1108
    %1110 = vrot.lane.b32.xlu0 %v737, 16
    %v1111 = vpop.permute.xlu0 %1110
    %1112 = vrot.lane.b32.xlu0 %v738, 16
    %v1113 = vpop.permute.xlu0 %1112
    %1114 = vrot.lane.b32.xlu0 %v739, 16
    %v1115 = vpop.permute.xlu0 %1114
    %1116 = vrot.lane.b32.xlu0 %v740, 16
    %v1117 = vpop.permute.xlu0 %1116
    %1118 = vrot.lane.b32.xlu0 %v741, 16
    %v1119 = vpop.permute.xlu0 %1118
    %1120 = vrot.lane.b32.xlu0 %v742, 16
    %v1121 = vpop.permute.xlu0 %1120
    %1122 = vrot.lane.b32.xlu0 %v743, 16
    %v1123 = vpop.permute.xlu0 %1122
    %1124 = vrot.lane.b32.xlu0 %v744, 16
    %v1125 = vpop.permute.xlu0 %1124
    %1126 = vrot.lane.b32.xlu0 %v745, 16
    %v1127 = vpop.permute.xlu0 %1126
    %1128 = vrot.lane.b32.xlu0 %v746, 16
    %v1129 = vpop.permute.xlu0 %1128
    %1130 = vrot.lane.b32.xlu0 %v747, 16
    %v1131 = vpop.permute.xlu0 %1130
    %1132 = vrot.lane.b32.xlu0 %v748, 16
    %v1133 = vpop.permute.xlu0 %1132
    %1134 = vrot.lane.b32.xlu0 %v749, 16
    %v1135 = vpop.permute.xlu0 %1134
    %1136 = vrot.lane.b32.xlu0 %v750, 16
    %v1137 = vpop.permute.xlu0 %1136
    %1138 = vrot.lane.b32.xlu0 %v751, 16
    %v1139 = vpop.permute.xlu0 %1138
    %v1204 = vsel %vm546, %v680, %v817
    %v1205 = vsel %vm546, %v681, %v819
    %v1206 = vsel %vm546, %v682, %v821
    %v1207 = vsel %vm546, %v683, %v823
    %v1208 = vsel %vm546, %v684, %v825
    %v1209 = vsel %vm546, %v685, %v827
    %v1210 = vsel %vm546, %v686, %v829
    %v1211 = vsel %vm546, %v687, %v831
    %v1212 = vsel %vm546, %v688, %v833
    %v1213 = vsel %vm546, %v689, %v835
    %v1214 = vsel %vm546, %v690, %v837
    %v1215 = vsel %vm546, %v691, %v839
    %v1216 = vsel %vm546, %v692, %v841
    %v1217 = vsel %vm546, %v693, %v843
    %v1218 = vsel %vm546, %v694, %v845
    %v1219 = vsel %vm546, %v695, %v847
    %v1220 = vsel %vm546, %v696, %v849
    %v1221 = vsel %vm546, %v697, %v851
    %v1222 = vsel %vm546, %v698, %v853
    %v1223 = vsel %vm546, %v699, %v855
    %v1224 = vsel %vm546, %v700, %v857
    %v1225 = vsel %vm546, %v701, %v859
    %v1226 = vsel %vm546, %v702, %v861
    %v1227 = vsel %vm546, %v703, %v863
    %v1228 = vsel %vm546, %v704, %v865
    %v1229 = vsel %vm546, %v705, %v867
    %v1230 = vsel %vm546, %v706, %v869
    %v1231 = vsel %vm546, %v707, %v871
    %v1232 = vsel %vm546, %v708, %v873
    %v1233 = vsel %vm546, %v709, %v875
    %v1234 = vsel %vm546, %v710, %v877
    %v1235 = vsel %vm546, %v711, %v879
    %v1236 = vsel %vm546, %v712, %v881
    %v1237 = vsel %vm546, %v713, %v883
    %v1238 = vsel %vm546, %v714, %v885
    %v1239 = vsel %vm546, %v715, %v887
    %v1240 = vsel %vm546, %v716, %v889
    %v1241 = vsel %vm546, %v717, %v891
    %v1242 = vsel %vm546, %v718, %v893
    %v1243 = vsel %vm546, %v719, %v895
    %v1244 = vsel %vm546, %v720, %v897
    %v1245 = vsel %vm546, %v721, %v899
    %v1246 = vsel %vm546, %v722, %v901
    %v1247 = vsel %vm546, %v723, %v903
    %v1248 = vsel %vm546, %v724, %v905
    %v1249 = vsel %vm546, %v725, %v907
    %v1250 = vsel %vm546, %v726, %v909
    %v1251 = vsel %vm546, %v727, %v911
    %v1252 = vsel %vm546, %v728, %v913
    %v1253 = vsel %vm546, %v729, %v915
    %v1254 = vsel %vm546, %v730, %v917
    %v1255 = vsel %vm546, %v731, %v919
    %v1256 = vsel %vm546, %v732, %v921
    %v1257 = vsel %vm546, %v733, %v923
    %v1258 = vsel %vm546, %v734, %v925
    %v1259 = vsel %vm546, %v735, %v927
    %v1260 = vsel %vm546, %v736, %v929
    %v1261 = vsel %vm546, %v737, %v931
    %v1262 = vsel %vm546, %v738, %v933
    %v1263 = vsel %vm546, %v739, %v935
    %v1264 = vsel %vm546, %v740, %v937
    %v1265 = vsel %vm546, %v741, %v939
    %v1266 = vsel %vm546, %v742, %v941
    %v1267 = vsel %vm546, %v743, %v943
    %v1268 = vsel %vm611, %v1204, %v1013
    %v1269 = vsel %vm611, %v1205, %v1015
    %v1270 = vsel %vm611, %v1206, %v1017
    %v1271 = vsel %vm611, %v1207, %v1019
    %v1272 = vsel %vm611, %v1208, %v1021
    %v1273 = vsel %vm611, %v1209, %v1023
    %v1274 = vsel %vm611, %v1210, %v1025
    %v1275 = vsel %vm611, %v1211, %v1027
    %v1276 = vsel %vm611, %v1212, %v1029
    %v1277 = vsel %vm611, %v1213, %v1031
    %v1278 = vsel %vm611, %v1214, %v1033
    %v1279 = vsel %vm611, %v1215, %v1035
    %v1280 = vsel %vm611, %v1216, %v1037
    %v1281 = vsel %vm611, %v1217, %v1039
    %v1282 = vsel %vm611, %v1218, %v1041
    %v1283 = vsel %vm611, %v1219, %v1043
    %v1284 = vsel %vm611, %v1220, %v1045
    %v1285 = vsel %vm611, %v1221, %v1047
    %v1286 = vsel %vm611, %v1222, %v1049
    %v1287 = vsel %vm611, %v1223, %v1051
    %v1288 = vsel %vm611, %v1224, %v1053
    %v1289 = vsel %vm611, %v1225, %v1055
    %v1290 = vsel %vm611, %v1226, %v1057
    %v1291 = vsel %vm611, %v1227, %v1059
    %v1292 = vsel %vm611, %v1228, %v1061
    %v1293 = vsel %vm611, %v1229, %v1063
    %v1294 = vsel %vm611, %v1230, %v1065
    %v1295 = vsel %vm611, %v1231, %v1067
    %v1296 = vsel %vm611, %v1232, %v1069
    %v1297 = vsel %vm611, %v1233, %v1071
    %v1298 = vsel %vm611, %v1234, %v1073
    %v1299 = vsel %vm611, %v1235, %v1075
    %v1300 = vsel %vm611, %v1236, %v1077
    %v1301 = vsel %vm611, %v1237, %v1079
    %v1302 = vsel %vm611, %v1238, %v1081
    %v1303 = vsel %vm611, %v1239, %v1083
    %v1304 = vsel %vm611, %v1240, %v1085
    %v1305 = vsel %vm611, %v1241, %v1087
    %v1306 = vsel %vm611, %v1242, %v1089
    %v1307 = vsel %vm611, %v1243, %v1091
    %v1308 = vsel %vm611, %v1244, %v1093
    %v1309 = vsel %vm611, %v1245, %v1095
    %v1310 = vsel %vm611, %v1246, %v1097
    %v1311 = vsel %vm611, %v1247, %v1099
    %v1312 = vsel %vm611, %v1248, %v1101
    %v1313 = vsel %vm611, %v1249, %v1103
    %v1314 = vsel %vm611, %v1250, %v1105
    %v1315 = vsel %vm611, %v1251, %v1107
    %v1316 = vsel %vm611, %v1252, %v1109
    %v1317 = vsel %vm611, %v1253, %v1111
    %v1318 = vsel %vm611, %v1254, %v1113
    %v1319 = vsel %vm611, %v1255, %v1115
    %v1320 = vsel %vm611, %v1256, %v1117
    %v1321 = vsel %vm611, %v1257, %v1119
    %v1322 = vsel %vm611, %v1258, %v1121
    %v1323 = vsel %vm611, %v1259, %v1123
    %v1324 = vsel %vm611, %v1260, %v1125
    %v1325 = vsel %vm611, %v1261, %v1127
    %v1326 = vsel %vm611, %v1262, %v1129
    %v1327 = vsel %vm611, %v1263, %v1131
    %v1328 = vsel %vm611, %v1264, %v1133
    %v1329 = vsel %vm611, %v1265, %v1135
    %v1330 = vsel %vm611, %v1266, %v1137
    %v1331 = vsel %vm611, %v1267, %v1139
    %s1332 = scalar_lea.vmem %s1, 32
    %v1333 = vld [vmem:[%s1332] sm:$0xff]
    %v1334 = vld [vmem:[%s1332 + $0x8] sm:$0xff]
    %v1335 = vld [vmem:[%s1332 + $0x10] sm:$0xff]
    %v1336 = vld [vmem:[%s1332 + $0x18] sm:$0xff]
    %vm1337 = vcmask 195584
    %v1339 = vsel %vm1337, %v1333, 0
    %v1342 = vsel %vm1337, %v1334, 0
    %v1345 = vsel %vm1337, %v1335, 0
    %v1348 = vsel %vm1337, %v1336, 0
    %v1351 = vsel %vm1337, %v1268, 0
    %v1354 = vsel %vm1337, %v1269, 0
    %v1357 = vsel %vm1337, %v1270, 0
    %v1360 = vsel %vm1337, %v1271, 0
    %v1363 = vsel %vm1337, %v1272, 0
    %v1366 = vsel %vm1337, %v1273, 0
    %v1369 = vsel %vm1337, %v1274, 0
    %v1372 = vsel %vm1337, %v1275, 0
    %v1375 = vsel %vm1337, %v1276, 0
    %v1378 = vsel %vm1337, %v1277, 0
    %v1381 = vsel %vm1337, %v1278, 0
    %v1384 = vsel %vm1337, %v1279, 0
    %v1387 = vsel %vm1337, %v1280, 0
    %v1390 = vsel %vm1337, %v1281, 0
    %v1393 = vsel %vm1337, %v1282, 0
    %v1396 = vsel %vm1337, %v1283, 0
    %v1399 = vsel %vm1337, %v1284, 0
    %v1402 = vsel %vm1337, %v1285, 0
    %v1405 = vsel %vm1337, %v1286, 0
    %v1408 = vsel %vm1337, %v1287, 0
    %v1411 = vsel %vm1337, %v1288, 0
    %v1414 = vsel %vm1337, %v1289, 0
    %v1417 = vsel %vm1337, %v1290, 0
    %v1420 = vsel %vm1337, %v1291, 0
    %v1423 = vsel %vm1337, %v1292, 0
    %v1426 = vsel %vm1337, %v1293, 0
    %v1429 = vsel %vm1337, %v1294, 0
    %v1432 = vsel %vm1337, %v1295, 0
    %v1435 = vsel %vm1337, %v1296, 0
    %v1438 = vsel %vm1337, %v1297, 0
    %v1441 = vsel %vm1337, %v1298, 0
    %v1444 = vsel %vm1337, %v1299, 0
    %v1447 = vsel %vm1337, %v1300, 0
    %v1450 = vsel %vm1337, %v1301, 0
    %v1453 = vsel %vm1337, %v1302, 0
    %v1456 = vsel %vm1337, %v1303, 0
    %v1459 = vsel %vm1337, %v1304, 0
    %v1462 = vsel %vm1337, %v1305, 0
    %v1465 = vsel %vm1337, %v1306, 0
    %v1468 = vsel %vm1337, %v1307, 0
    %v1471 = vsel %vm1337, %v1308, 0
    %v1474 = vsel %vm1337, %v1309, 0
    %v1477 = vsel %vm1337, %v1310, 0
    %v1480 = vsel %vm1337, %v1311, 0
    %v1483 = vsel %vm1337, %v1312, 0
    %v1486 = vsel %vm1337, %v1313, 0
    %v1489 = vsel %vm1337, %v1314, 0
    %v1492 = vsel %vm1337, %v1315, 0
    %v1495 = vsel %vm1337, %v1316, 0
    %v1498 = vsel %vm1337, %v1317, 0
    %v1501 = vsel %vm1337, %v1318, 0
    %v1504 = vsel %vm1337, %v1319, 0
    %v1507 = vsel %vm1337, %v1320, 0
    %v1510 = vsel %vm1337, %v1321, 0
    %v1513 = vsel %vm1337, %v1322, 0
    %v1516 = vsel %vm1337, %v1323, 0
    %v1519 = vsel %vm1337, %v1324, 0
    %v1522 = vsel %vm1337, %v1325, 0
    %v1525 = vsel %vm1337, %v1326, 0
    %v1528 = vsel %vm1337, %v1327, 0
    %v1531 = vsel %vm1337, %v1328, 0
    %v1534 = vsel %vm1337, %v1329, 0
    %v1537 = vsel %vm1337, %v1330, 0
    %v1540 = vsel %vm1337, %v1331, 0
    %1542 = vmatprep.subr.mxu0 0.0
    %1543 = vmatpush1.xpose.msra.mxu0 %v1351
    %1544 = vmatprep.subr.mxu0 0.0
    %1545 = vmatpush1.xpose.msra.mxu0 %v1354
    %1546 = vmatprep.subr.mxu0 0.0
    %1547 = vmatpush1.xpose.msra.mxu0 %v1357
    %1548 = vmatprep.subr.mxu0 0.0
    %1549 = vmatpush1.xpose.msra.mxu0 %v1360
    %1550 = vmatprep.subr.mxu0 0.0
    %1551 = vmatpush1.xpose.msra.mxu0 %v1363
    %1552 = vmatprep.subr.mxu0 0.0
    %1553 = vmatpush1.xpose.msra.mxu0 %v1366
    %1554 = vmatprep.subr.mxu0 0.0
    %1555 = vmatpush1.xpose.msra.mxu0 %v1369
    %1556 = vmatprep.subr.mxu0 0.0
    %1557 = vmatpush1.xpose.msra.mxu0 %v1372
    %1558 = vmatprep.subr.mxu0 0.0
    %1559 = vmatpush1.xpose.msra.mxu0 %v1375
    %1560 = vmatprep.subr.mxu0 0.0
    %1561 = vmatpush1.xpose.msra.mxu0 %v1378
    %1562 = vmatprep.subr.mxu0 0.0
    %1563 = vmatpush1.xpose.msra.mxu0 %v1381
    %1564 = vmatprep.subr.mxu0 0.0
    %1565 = vmatpush1.xpose.msra.mxu0 %v1384
    %1566 = vmatprep.subr.mxu0 0.0
    %1567 = vmatpush1.xpose.msra.mxu0 %v1387
    %1568 = vmatprep.subr.mxu0 0.0
    %1569 = vmatpush1.xpose.msra.mxu0 %v1390
    %1570 = vmatprep.subr.mxu0 0.0
    %1571 = vmatpush1.xpose.msra.mxu0 %v1393
    %1572 = vmatprep.subr.mxu0 0.0
    %1573 = vmatpush1.xpose.msra.mxu0 %v1396
    %1574 = vmatprep.subr.mxu0 0.0
    %1575 = vmatpush1.xpose.msra.mxu0 %v1399
    %1576 = vmatprep.subr.mxu0 0.0
    %1577 = vmatpush1.xpose.msra.mxu0 %v1402
    %1578 = vmatprep.subr.mxu0 0.0
    %1579 = vmatpush1.xpose.msra.mxu0 %v1405
    %1580 = vmatprep.subr.mxu0 0.0
    %1581 = vmatpush1.xpose.msra.mxu0 %v1408
    %1582 = vmatprep.subr.mxu0 0.0
    %1583 = vmatpush1.xpose.msra.mxu0 %v1411
    %1584 = vmatprep.subr.mxu0 0.0
    %1585 = vmatpush1.xpose.msra.mxu0 %v1414
    %1586 = vmatprep.subr.mxu0 0.0
    %1587 = vmatpush1.xpose.msra.mxu0 %v1417
    %1588 = vmatprep.subr.mxu0 0.0
    %1589 = vmatpush1.xpose.msra.mxu0 %v1420
    %1590 = vmatprep.subr.mxu0 0.0
    %1591 = vmatpush1.xpose.msra.mxu0 %v1423
    %1592 = vmatprep.subr.mxu0 0.0
    %1593 = vmatpush1.xpose.msra.mxu0 %v1426
    %1594 = vmatprep.subr.mxu0 0.0
    %1595 = vmatpush1.xpose.msra.mxu0 %v1429
    %1596 = vmatprep.subr.mxu0 0.0
    %1597 = vmatpush1.xpose.msra.mxu0 %v1432
    %1598 = vmatprep.subr.mxu0 0.0
    %1599 = vmatpush1.xpose.msra.mxu0 %v1435
    %1600 = vmatprep.subr.mxu0 0.0
    %1601 = vmatpush1.xpose.msra.mxu0 %v1438
    %1602 = vmatprep.subr.mxu0 0.0
    %1603 = vmatpush1.xpose.msra.mxu0 %v1441
    %1604 = vmatprep.subr.mxu0 0.0
    %1605 = vmatpush1.xpose.msra.mxu0 %v1444
    %1606 = vmatprep.mubr.f32.mxu0 0.0
    %1607 = vmatmul.mubr.f32.gmra.mrb[0].mxu0 %v1339
    %v1608 = vpop.f32.mrb[0].mxu0
    %v1609 = vadd.f32 0.0, %v1608
    %v1610 = vpop.f32.mrb[0].mxu0
    %v1611 = vadd.f32 0.0, %v1610
    %1612 = vmatprep.mubr.f32.mxu0 0.0
    %1613 = vmatmul.mubr.f32.gmra.mrb[0].mxu0 %v1342
    %v1614 = vpop.f32.mrb[0].mxu0
    %v1615 = vadd.f32 0.0, %v1614
    %v1616 = vpop.f32.mrb[0].mxu0
    %v1617 = vadd.f32 0.0, %v1616
    %1618 = vmatprep.mubr.f32.mxu0 0.0
    %1619 = vmatmul.mubr.f32.gmra.mrb[0].mxu0 %v1345
    %v1620 = vpop.f32.mrb[0].mxu0
    %v1621 = vadd.f32 0.0, %v1620
    %v1622 = vpop.f32.mrb[0].mxu0
    %v1623 = vadd.f32 0.0, %v1622
    %1624 = vmatprep.mubr.f32.mxu0 0.0
    %1625 = vmatmul.mubr.f32.gmra.mrb[0].mxu0 %v1348
    %v1626 = vpop.f32.mrb[0].mxu0
    %v1627 = vadd.f32 0.0, %v1626
    %v1628 = vpop.f32.mrb[0].mxu0
    %v1629 = vadd.f32 0.0, %v1628
    %1630 = vdwg.mxu0
    %1631 = vmatprep.subr.mxu0 0.0
    %1632 = vmatpush1.xpose.msra.mxu0 %v1447
    %1633 = vmatprep.subr.mxu0 0.0
    %1634 = vmatpush1.xpose.msra.mxu0 %v1450
    %1635 = vmatprep.subr.mxu0 0.0
    %1636 = vmatpush1.xpose.msra.mxu0 %v1453
    %1637 = vmatprep.subr.mxu0 0.0
    %1638 = vmatpush1.xpose.msra.mxu0 %v1456
    %1639 = vmatprep.subr.mxu0 0.0
    %1640 = vmatpush1.xpose.msra.mxu0 %v1459
    %1641 = vmatprep.subr.mxu0 0.0
    %1642 = vmatpush1.xpose.msra.mxu0 %v1462
    %1643 = vmatprep.subr.mxu0 0.0
    %1644 = vmatpush1.xpose.msra.mxu0 %v1465
    %1645 = vmatprep.subr.mxu0 0.0
    %1646 = vmatpush1.xpose.msra.mxu0 %v1468
    %1647 = vmatprep.subr.mxu0 0.0
    %1648 = vmatpush1.xpose.msra.mxu0 %v1471
    %1649 = vmatprep.subr.mxu0 0.0
    %1650 = vmatpush1.xpose.msra.mxu0 %v1474
    %1651 = vmatprep.subr.mxu0 0.0
    %1652 = vmatpush1.xpose.msra.mxu0 %v1477
    %1653 = vmatprep.subr.mxu0 0.0
    %1654 = vmatpush1.xpose.msra.mxu0 %v1480
    %1655 = vmatprep.subr.mxu0 0.0
    %1656 = vmatpush1.xpose.msra.mxu0 %v1483
    %1657 = vmatprep.subr.mxu0 0.0
    %1658 = vmatpush1.xpose.msra.mxu0 %v1486
    %1659 = vmatprep.subr.mxu0 0.0
    %1660 = vmatpush1.xpose.msra.mxu0 %v1489
    %1661 = vmatprep.subr.mxu0 0.0
    %1662 = vmatpush1.xpose.msra.mxu0 %v1492
    %1663 = vmatprep.subr.mxu0 0.0
    %1664 = vmatpush1.xpose.msra.mxu0 %v1495
    %1665 = vmatprep.subr.mxu0 0.0
    %1666 = vmatpush1.xpose.msra.mxu0 %v1498
    %1667 = vmatprep.subr.mxu0 0.0
    %1668 = vmatpush1.xpose.msra.mxu0 %v1501
    %1669 = vmatprep.subr.mxu0 0.0
    %1670 = vmatpush1.xpose.msra.mxu0 %v1504
    %1671 = vmatprep.subr.mxu0 0.0
    %1672 = vmatpush1.xpose.msra.mxu0 %v1507
    %1673 = vmatprep.subr.mxu0 0.0
    %1674 = vmatpush1.xpose.msra.mxu0 %v1510
    %1675 = vmatprep.subr.mxu0 0.0
    %1676 = vmatpush1.xpose.msra.mxu0 %v1513
    %1677 = vmatprep.subr.mxu0 0.0
    %1678 = vmatpush1.xpose.msra.mxu0 %v1516
    %1679 = vmatprep.subr.mxu0 0.0
    %1680 = vmatpush1.xpose.msra.mxu0 %v1519
    %1681 = vmatprep.subr.mxu0 0.0
    %1682 = vmatpush1.xpose.msra.mxu0 %v1522
    %1683 = vmatprep.subr.mxu0 0.0
    %1684 = vmatpush1.xpose.msra.mxu0 %v1525
    %1685 = vmatprep.subr.mxu0 0.0
    %1686 = vmatpush1.xpose.msra.mxu0 %v1528
    %1687 = vmatprep.subr.mxu0 0.0
    %1688 = vmatpush1.xpose.msra.mxu0 %v1531
    %1689 = vmatprep.subr.mxu0 0.0
    %1690 = vmatpush1.xpose.msra.mxu0 %v1534
    %1691 = vmatprep.subr.mxu0 0.0
    %1692 = vmatpush1.xpose.msra.mxu0 %v1537
    %1693 = vmatprep.subr.mxu0 0.0
    %1694 = vmatpush1.xpose.msra.mxu0 %v1540
    %1695 = vmatprep.mubr.f32.mxu0 0.0
    %1696 = vmatmul.mubr.f32.gmra.mrb[0].mxu0 %v1339
    %v1697 = vpop.f32.mrb[0].mxu0
    %v1698 = vadd.f32 0.0, %v1697
    %v1699 = vpop.f32.mrb[0].mxu0
    %v1700 = vadd.f32 0.0, %v1699
    %1701 = vmatprep.mubr.f32.mxu0 0.0
    %1702 = vmatmul.mubr.f32.gmra.mrb[0].mxu0 %v1342
    %v1703 = vpop.f32.mrb[0].mxu0
    %v1704 = vadd.f32 0.0, %v1703
    %v1705 = vpop.f32.mrb[0].mxu0
    %v1706 = vadd.f32 0.0, %v1705
    %1707 = vmatprep.mubr.f32.mxu0 0.0
    %1708 = vmatmul.mubr.f32.gmra.mrb[0].mxu0 %v1345
    %v1709 = vpop.f32.mrb[0].mxu0
    %v1710 = vadd.f32 0.0, %v1709
    %v1711 = vpop.f32.mrb[0].mxu0
    %v1712 = vadd.f32 0.0, %v1711
    %1713 = vmatprep.mubr.f32.mxu0 0.0
    %1714 = vmatmul.mubr.f32.gmra.mrb[0].mxu0 %v1348
    %v1715 = vpop.f32.mrb[0].mxu0
    %v1716 = vadd.f32 0.0, %v1715
    %v1717 = vpop.f32.mrb[0].mxu0
    %v1718 = vadd.f32 0.0, %v1717
    %1719 = vdwg.mxu0
    %v1721 = vsel %vm1337, %v676, 0
    %v1724 = vsel %vm1337, %v677, 0
    %v1727 = vsel %vm1337, %v678, 0
    %v1730 = vsel %vm1337, %v679, 0
    %v1733 = vsel %vm1337, %v612, 0
    %v1736 = vsel %vm1337, %v613, 0
    %v1739 = vsel %vm1337, %v614, 0
    %v1742 = vsel %vm1337, %v615, 0
    %v1745 = vsel %vm1337, %v616, 0
    %v1748 = vsel %vm1337, %v617, 0
    %v1751 = vsel %vm1337, %v618, 0
    %v1754 = vsel %vm1337, %v619, 0
    %v1757 = vsel %vm1337, %v620, 0
    %v1760 = vsel %vm1337, %v621, 0
    %v1763 = vsel %vm1337, %v622, 0
    %v1766 = vsel %vm1337, %v623, 0
    %v1769 = vsel %vm1337, %v624, 0
    %v1772 = vsel %vm1337, %v625, 0
    %v1775 = vsel %vm1337, %v626, 0
    %v1778 = vsel %vm1337, %v627, 0
    %v1781 = vsel %vm1337, %v628, 0
    %v1784 = vsel %vm1337, %v629, 0
    %v1787 = vsel %vm1337, %v630, 0
    %v1790 = vsel %vm1337, %v631, 0
    %v1793 = vsel %vm1337, %v632, 0
    %v1796 = vsel %vm1337, %v633, 0
    %v1799 = vsel %vm1337, %v634, 0
    %v1802 = vsel %vm1337, %v635, 0
    %v1805 = vsel %vm1337, %v636, 0
    %v1808 = vsel %vm1337, %v637, 0
    %v1811 = vsel %vm1337, %v638, 0
    %v1814 = vsel %vm1337, %v639, 0
    %v1817 = vsel %vm1337, %v640, 0
    %v1820 = vsel %vm1337, %v641, 0
    %v1823 = vsel %vm1337, %v642, 0
    %v1826 = vsel %vm1337, %v643, 0
    %v1829 = vsel %vm1337, %v644, 0
    %v1832 = vsel %vm1337, %v645, 0
    %v1835 = vsel %vm1337, %v646, 0
    %v1838 = vsel %vm1337, %v647, 0
    %v1841 = vsel %vm1337, %v648, 0
    %v1844 = vsel %vm1337, %v649, 0
    %v1847 = vsel %vm1337, %v650, 0
    %v1850 = vsel %vm1337, %v651, 0
    %v1853 = vsel %vm1337, %v652, 0
    %v1856 = vsel %vm1337, %v653, 0
    %v1859 = vsel %vm1337, %v654, 0
    %v1862 = vsel %vm1337, %v655, 0
    %v1865 = vsel %vm1337, %v656, 0
    %v1868 = vsel %vm1337, %v657, 0
    %v1871 = vsel %vm1337, %v658, 0
    %v1874 = vsel %vm1337, %v659, 0
    %v1877 = vsel %vm1337, %v660, 0
    %v1880 = vsel %vm1337, %v661, 0
    %v1883 = vsel %vm1337, %v662, 0
    %v1886 = vsel %vm1337, %v663, 0
    %v1889 = vsel %vm1337, %v664, 0
    %v1892 = vsel %vm1337, %v665, 0
    %v1895 = vsel %vm1337, %v666, 0
    %v1898 = vsel %vm1337, %v667, 0
    %v1901 = vsel %vm1337, %v668, 0
    %v1904 = vsel %vm1337, %v669, 0
    %v1907 = vsel %vm1337, %v670, 0
    %v1910 = vsel %vm1337, %v671, 0
    %v1913 = vsel %vm1337, %v672, 0
    %v1916 = vsel %vm1337, %v673, 0
    %v1919 = vsel %vm1337, %v674, 0
    %v1922 = vsel %vm1337, %v675, 0
    %1924 = vmatprep.subr.mxu0 0.0
    %1925 = vmatpush1.xpose.msra.mxu0 %v1733
    %1926 = vmatprep.subr.mxu0 0.0
    %1927 = vmatpush1.xpose.msra.mxu0 %v1736
    %1928 = vmatprep.subr.mxu0 0.0
    %1929 = vmatpush1.xpose.msra.mxu0 %v1739
    %1930 = vmatprep.subr.mxu0 0.0
    %1931 = vmatpush1.xpose.msra.mxu0 %v1742
    %1932 = vmatprep.subr.mxu0 0.0
    %1933 = vmatpush1.xpose.msra.mxu0 %v1745
    %1934 = vmatprep.subr.mxu0 0.0
    %1935 = vmatpush1.xpose.msra.mxu0 %v1748
    %1936 = vmatprep.subr.mxu0 0.0
    %1937 = vmatpush1.xpose.msra.mxu0 %v1751
    %1938 = vmatprep.subr.mxu0 0.0
    %1939 = vmatpush1.xpose.msra.mxu0 %v1754
    %1940 = vmatprep.subr.mxu0 0.0
    %1941 = vmatpush1.xpose.msra.mxu0 %v1757
    %1942 = vmatprep.subr.mxu0 0.0
    %1943 = vmatpush1.xpose.msra.mxu0 %v1760
    %1944 = vmatprep.subr.mxu0 0.0
    %1945 = vmatpush1.xpose.msra.mxu0 %v1763
    %1946 = vmatprep.subr.mxu0 0.0
    %1947 = vmatpush1.xpose.msra.mxu0 %v1766
    %1948 = vmatprep.subr.mxu0 0.0
    %1949 = vmatpush1.xpose.msra.mxu0 %v1769
    %1950 = vmatprep.subr.mxu0 0.0
    %1951 = vmatpush1.xpose.msra.mxu0 %v1772
    %1952 = vmatprep.subr.mxu0 0.0
    %1953 = vmatpush1.xpose.msra.mxu0 %v1775
    %1954 = vmatprep.subr.mxu0 0.0
    %1955 = vmatpush1.xpose.msra.mxu0 %v1778
    %1956 = vmatprep.subr.mxu0 0.0
    %1957 = vmatpush1.xpose.msra.mxu0 %v1781
    %1958 = vmatprep.subr.mxu0 0.0
    %1959 = vmatpush1.xpose.msra.mxu0 %v1784
    %1960 = vmatprep.subr.mxu0 0.0
    %1961 = vmatpush1.xpose.msra.mxu0 %v1787
    %1962 = vmatprep.subr.mxu0 0.0
    %1963 = vmatpush1.xpose.msra.mxu0 %v1790
    %1964 = vmatprep.subr.mxu0 0.0
    %1965 = vmatpush1.xpose.msra.mxu0 %v1793
    %1966 = vmatprep.subr.mxu0 0.0
    %1967 = vmatpush1.xpose.msra.mxu0 %v1796
    %1968 = vmatprep.subr.mxu0 0.0
    %1969 = vmatpush1.xpose.msra.mxu0 %v1799
    %1970 = vmatprep.subr.mxu0 0.0
    %1971 = vmatpush1.xpose.msra.mxu0 %v1802
    %1972 = vmatprep.subr.mxu0 0.0
    %1973 = vmatpush1.xpose.msra.mxu0 %v1805
    %1974 = vmatprep.subr.mxu0 0.0
    %1975 = vmatpush1.xpose.msra.mxu0 %v1808
    %1976 = vmatprep.subr.mxu0 0.0
    %1977 = vmatpush1.xpose.msra.mxu0 %v1811
    %1978 = vmatprep.subr.mxu0 0.0
    %1979 = vmatpush1.xpose.msra.mxu0 %v1814
    %1980 = vmatprep.subr.mxu0 0.0
    %1981 = vmatpush1.xpose.msra.mxu0 %v1817
    %1982 = vmatprep.subr.mxu0 0.0
    %1983 = vmatpush1.xpose.msra.mxu0 %v1820
    %1984 = vmatprep.subr.mxu0 0.0
    %1985 = vmatpush1.xpose.msra.mxu0 %v1823
    %1986 = vmatprep.subr.mxu0 0.0
    %1987 = vmatpush1.xpose.msra.mxu0 %v1826
    %1988 = vmatprep.mubr.f32.mxu0 0.0
    %1989 = vmatmul.mubr.f32.gmra.mrb[0].mxu0 %v1721
    %v1990 = vpop.f32.mrb[0].mxu0
    %v1991 = vadd.f32 %v1609, %v1990
    %v1992 = vpop.f32.mrb[0].mxu0
    %v1993 = vadd.f32 %v1611, %v1992
    %1994 = vmatprep.mubr.f32.mxu0 0.0
    %1995 = vmatmul.mubr.f32.gmra.mrb[0].mxu0 %v1724
    %v1996 = vpop.f32.mrb[0].mxu0
    %v1997 = vadd.f32 %v1615, %v1996
    %v1998 = vpop.f32.mrb[0].mxu0
    %v1999 = vadd.f32 %v1617, %v1998
    %2000 = vmatprep.mubr.f32.mxu0 0.0
    %2001 = vmatmul.mubr.f32.gmra.mrb[0].mxu0 %v1727
    %v2002 = vpop.f32.mrb[0].mxu0
    %v2003 = vadd.f32 %v1621, %v2002
    %v2004 = vpop.f32.mrb[0].mxu0
    %v2005 = vadd.f32 %v1623, %v2004
    %2006 = vmatprep.mubr.f32.mxu0 0.0
    %2007 = vmatmul.mubr.f32.gmra.mrb[0].mxu0 %v1730
    %v2008 = vpop.f32.mrb[0].mxu0
    %v2009 = vadd.f32 %v1627, %v2008
    %v2010 = vpop.f32.mrb[0].mxu0
    %v2011 = vadd.f32 %v1629, %v2010
    %2012 = vdwg.mxu0
    %2013 = vmatprep.subr.mxu0 0.0
    %2014 = vmatpush1.xpose.msra.mxu0 %v1829
    %2015 = vmatprep.subr.mxu0 0.0
    %2016 = vmatpush1.xpose.msra.mxu0 %v1832
    %2017 = vmatprep.subr.mxu0 0.0
    %2018 = vmatpush1.xpose.msra.mxu0 %v1835
    %2019 = vmatprep.subr.mxu0 0.0
    %2020 = vmatpush1.xpose.msra.mxu0 %v1838
    %2021 = vmatprep.subr.mxu0 0.0
    %2022 = vmatpush1.xpose.msra.mxu0 %v1841
    %2023 = vmatprep.subr.mxu0 0.0
    %2024 = vmatpush1.xpose.msra.mxu0 %v1844
    %2025 = vmatprep.subr.mxu0 0.0
    %2026 = vmatpush1.xpose.msra.mxu0 %v1847
    %2027 = vmatprep.subr.mxu0 0.0
    %2028 = vmatpush1.xpose.msra.mxu0 %v1850
    %2029 = vmatprep.subr.mxu0 0.0
    %2030 = vmatpush1.xpose.msra.mxu0 %v1853
    %2031 = vmatprep.subr.mxu0 0.0
    %2032 = vmatpush1.xpose.msra.mxu0 %v1856
    %2033 = vmatprep.subr.mxu0 0.0
    %2034 = vmatpush1.xpose.msra.mxu0 %v1859
    %2035 = vmatprep.subr.mxu0 0.0
    %2036 = vmatpush1.xpose.msra.mxu0 %v1862
    %2037 = vmatprep.subr.mxu0 0.0
    %2038 = vmatpush1.xpose.msra.mxu0 %v1865
    %2039 = vmatprep.subr.mxu0 0.0
    %2040 = vmatpush1.xpose.msra.mxu0 %v1868
    %2041 = vmatprep.subr.mxu0 0.0
    %2042 = vmatpush1.xpose.msra.mxu0 %v1871
    %2043 = vmatprep.subr.mxu0 0.0
    %2044 = vmatpush1.xpose.msra.mxu0 %v1874
    %2045 = vmatprep.subr.mxu0 0.0
    %2046 = vmatpush1.xpose.msra.mxu0 %v1877
    %2047 = vmatprep.subr.mxu0 0.0
    %2048 = vmatpush1.xpose.msra.mxu0 %v1880
    %2049 = vmatprep.subr.mxu0 0.0
    %2050 = vmatpush1.xpose.msra.mxu0 %v1883
    %2051 = vmatprep.subr.mxu0 0.0
    %2052 = vmatpush1.xpose.msra.mxu0 %v1886
    %2053 = vmatprep.subr.mxu0 0.0
    %2054 = vmatpush1.xpose.msra.mxu0 %v1889
    %2055 = vmatprep.subr.mxu0 0.0
    %2056 = vmatpush1.xpose.msra.mxu0 %v1892
    %2057 = vmatprep.subr.mxu0 0.0
    %2058 = vmatpush1.xpose.msra.mxu0 %v1895
    %2059 = vmatprep.subr.mxu0 0.0
    %2060 = vmatpush1.xpose.msra.mxu0 %v1898
    %2061 = vmatprep.subr.mxu0 0.0
    %2062 = vmatpush1.xpose.msra.mxu0 %v1901
    %2063 = vmatprep.subr.mxu0 0.0
    %2064 = vmatpush1.xpose.msra.mxu0 %v1904
    %2065 = vmatprep.subr.mxu0 0.0
    %2066 = vmatpush1.xpose.msra.mxu0 %v1907
    %2067 = vmatprep.subr.mxu0 0.0
    %2068 = vmatpush1.xpose.msra.mxu0 %v1910
    %2069 = vmatprep.subr.mxu0 0.0
    %2070 = vmatpush1.xpose.msra.mxu0 %v1913
    %2071 = vmatprep.subr.mxu0 0.0
    %2072 = vmatpush1.xpose.msra.mxu0 %v1916
    %2073 = vmatprep.subr.mxu0 0.0
    %2074 = vmatpush1.xpose.msra.mxu0 %v1919
    %2075 = vmatprep.subr.mxu0 0.0
    %2076 = vmatpush1.xpose.msra.mxu0 %v1922
    %2077 = vmatprep.mubr.f32.mxu0 0.0
    %2078 = vmatmul.mubr.f32.gmra.mrb[0].mxu0 %v1721
    %v2079 = vpop.f32.mrb[0].mxu0
    %v2080 = vadd.f32 %v1698, %v2079
    %v2081 = vpop.f32.mrb[0].mxu0
    %v2082 = vadd.f32 %v1700, %v2081
    %2083 = vmatprep.mubr.f32.mxu0 0.0
    %2084 = vmatmul.mubr.f32.gmra.mrb[0].mxu0 %v1724
    %v2085 = vpop.f32.mrb[0].mxu0
    %v2086 = vadd.f32 %v1704, %v2085
    %v2087 = vpop.f32.mrb[0].mxu0
    %v2088 = vadd.f32 %v1706, %v2087
    %2089 = vmatprep.mubr.f32.mxu0 0.0
    %2090 = vmatmul.mubr.f32.gmra.mrb[0].mxu0 %v1727
    %v2091 = vpop.f32.mrb[0].mxu0
    %v2092 = vadd.f32 %v1710, %v2091
    %v2093 = vpop.f32.mrb[0].mxu0
    %v2094 = vadd.f32 %v1712, %v2093
    %2095 = vmatprep.mubr.f32.mxu0 0.0
    %2096 = vmatmul.mubr.f32.gmra.mrb[0].mxu0 %v1730
    %v2097 = vpop.f32.mrb[0].mxu0
    %v2098 = vadd.f32 %v1716, %v2097
    %v2099 = vpop.f32.mrb[0].mxu0
    %v2100 = vadd.f32 %v1718, %v2099
    %2101 = vdwg.mxu0
    %v2102 = vld [vmem:[%s21 + $0x2] sm:$0xff]
    %v2103 = vld [vmem:[%s21 + $0xa] sm:$0xff]
    %v2104 = vld [vmem:[%s21 + $0x1a] sm:$0xff]
    %v2105 = vld [vmem:[%s21 + $0x22] sm:$0xff]
    %v2106 = vld [vmem:[%s21 + $0x32] sm:$0xff]
    %v2107 = vld [vmem:[%s21 + $0x3a] sm:$0xff]
    %v2108 = vld [vmem:[%s21 + $0x4a] sm:$0xff]
    %v2109 = vld [vmem:[%s21 + $0x52] sm:$0xff]
    %v2110 = vld [vmem:[%s21 + $0x62] sm:$0xff]
    %v2111 = vld [vmem:[%s21 + $0x6a] sm:$0xff]
    %v2112 = vld [vmem:[%s21 + $0x7a] sm:$0xff]
    %v2113 = vld [vmem:[%s21 + $0x82] sm:$0xff]
    %v2114 = vld [vmem:[%s21 + $0x92] sm:$0xff]
    %v2115 = vld [vmem:[%s21 + $0x9a] sm:$0xff]
    %v2116 = vld [vmem:[%s21 + $0xaa] sm:$0xff]
    %v2117 = vld [vmem:[%s21 + $0xb2] sm:$0xff]
    %v2118 = vld [vmem:[%s21 + $0xc2] sm:$0xff]
    %v2119 = vld [vmem:[%s21 + $0xca] sm:$0xff]
    %v2120 = vld [vmem:[%s21 + $0xda] sm:$0xff]
    %v2121 = vld [vmem:[%s21 + $0xe2] sm:$0xff]
    %v2122 = vld [vmem:[%s21 + $0xf2] sm:$0xff]
    %v2123 = vld [vmem:[%s21 + $0xfa] sm:$0xff]
    %v2124 = vld [vmem:[%s21 + $0x10a] sm:$0xff]
    %v2125 = vld [vmem:[%s21 + $0x112] sm:$0xff]
    %v2126 = vld [vmem:[%s21 + $0x122] sm:$0xff]
    %v2127 = vld [vmem:[%s21 + $0x12a] sm:$0xff]
    %v2128 = vld [vmem:[%s21 + $0x13a] sm:$0xff]
    %v2129 = vld [vmem:[%s21 + $0x142] sm:$0xff]
    %v2130 = vld [vmem:[%s21 + $0x152] sm:$0xff]
    %v2131 = vld [vmem:[%s21 + $0x15a] sm:$0xff]
    %v2132 = vld [vmem:[%s21 + $0x16a] sm:$0xff]
    %v2133 = vld [vmem:[%s21 + $0x172] sm:$0xff]
    %v2134 = vld [vmem:[%s21 + $0x182] sm:$0xff]
    %v2135 = vld [vmem:[%s21 + $0x18a] sm:$0xff]
    %v2136 = vld [vmem:[%s21 + $0x19a] sm:$0xff]
    %v2137 = vld [vmem:[%s21 + $0x1a2] sm:$0xff]
    %v2138 = vld [vmem:[%s21 + $0x1b2] sm:$0xff]
    %v2139 = vld [vmem:[%s21 + $0x1ba] sm:$0xff]
    %v2140 = vld [vmem:[%s21 + $0x1ca] sm:$0xff]
    %v2141 = vld [vmem:[%s21 + $0x1d2] sm:$0xff]
    %v2142 = vld [vmem:[%s21 + $0x1e2] sm:$0xff]
    %v2143 = vld [vmem:[%s21 + $0x1ea] sm:$0xff]
    %v2144 = vld [vmem:[%s21 + $0x1fa] sm:$0xff]
    %v2145 = vld [vmem:[%s21 + $0x202] sm:$0xff]
    %v2146 = vld [vmem:[%s21 + $0x212] sm:$0xff]
    %v2147 = vld [vmem:[%s21 + $0x21a] sm:$0xff]
    %v2148 = vld [vmem:[%s21 + $0x22a] sm:$0xff]
    %v2149 = vld [vmem:[%s21 + $0x232] sm:$0xff]
    %v2150 = vld [vmem:[%s21 + $0x242] sm:$0xff]
    %v2151 = vld [vmem:[%s21 + $0x24a] sm:$0xff]
    %v2152 = vld [vmem:[%s21 + $0x25a] sm:$0xff]
    %v2153 = vld [vmem:[%s21 + $0x262] sm:$0xff]
    %v2154 = vld [vmem:[%s21 + $0x272] sm:$0xff]
    %v2155 = vld [vmem:[%s21 + $0x27a] sm:$0xff]
    %v2156 = vld [vmem:[%s21 + $0x28a] sm:$0xff]
    %v2157 = vld [vmem:[%s21 + $0x292] sm:$0xff]
    %v2158 = vld [vmem:[%s21 + $0x2a2] sm:$0xff]
    %v2159 = vld [vmem:[%s21 + $0x2aa] sm:$0xff]
    %v2160 = vld [vmem:[%s21 + $0x2ba] sm:$0xff]
    %v2161 = vld [vmem:[%s21 + $0x2c2] sm:$0xff]
    %v2162 = vld [vmem:[%s21 + $0x2d2] sm:$0xff]
    %v2163 = vld [vmem:[%s21 + $0x2da] sm:$0xff]
    %v2164 = vld [vmem:[%s21 + $0x2ea] sm:$0xff]
    %v2165 = vld [vmem:[%s21 + $0x2f2] sm:$0xff]
    %v2166 = vld [vmem:[%s21 + $0x302] sm:$0xff]
    %v2167 = vld [vmem:[%s21 + $0x30a] sm:$0xff]
    %v2168 = vld [vmem:[%s21 + $0x31a] sm:$0xff]
    %v2169 = vld [vmem:[%s21 + $0x322] sm:$0xff]
    %v2170 = vld [vmem:[%s21 + $0x332] sm:$0xff]
    %v2171 = vld [vmem:[%s21 + $0x33a] sm:$0xff]
    %v2172 = vld [vmem:[%s21 + $0x34a] sm:$0xff]
    %v2173 = vld [vmem:[%s21 + $0x352] sm:$0xff]
    %2238 = vrot.lane.b32.xlu0 %v2106, 8
    %v2239 = vpop.permute.xlu0 %2238
    %2240 = vrot.lane.b32.xlu0 %v2107, 8
    %v2241 = vpop.permute.xlu0 %2240
    %2242 = vrot.lane.b32.xlu0 %v2108, 8
    %v2243 = vpop.permute.xlu0 %2242
    %2244 = vrot.lane.b32.xlu0 %v2109, 8
    %v2245 = vpop.permute.xlu0 %2244
    %2246 = vrot.lane.b32.xlu0 %v2110, 8
    %v2247 = vpop.permute.xlu0 %2246
    %2248 = vrot.lane.b32.xlu0 %v2111, 8
    %v2249 = vpop.permute.xlu0 %2248
    %2250 = vrot.lane.b32.xlu0 %v2112, 8
    %v2251 = vpop.permute.xlu0 %2250
    %2252 = vrot.lane.b32.xlu0 %v2113, 8
    %v2253 = vpop.permute.xlu0 %2252
    %2254 = vrot.lane.b32.xlu0 %v2114, 8
    %v2255 = vpop.permute.xlu0 %2254
    %2256 = vrot.lane.b32.xlu0 %v2115, 8
    %v2257 = vpop.permute.xlu0 %2256
    %2258 = vrot.lane.b32.xlu0 %v2116, 8
    %v2259 = vpop.permute.xlu0 %2258
    %2260 = vrot.lane.b32.xlu0 %v2117, 8
    %v2261 = vpop.permute.xlu0 %2260
    %2262 = vrot.lane.b32.xlu0 %v2118, 8
    %v2263 = vpop.permute.xlu0 %2262
    %2264 = vrot.lane.b32.xlu0 %v2119, 8
    %v2265 = vpop.permute.xlu0 %2264
    %2266 = vrot.lane.b32.xlu0 %v2120, 8
    %v2267 = vpop.permute.xlu0 %2266
    %2268 = vrot.lane.b32.xlu0 %v2121, 8
    %v2269 = vpop.permute.xlu0 %2268
    %2270 = vrot.lane.b32.xlu0 %v2122, 8
    %v2271 = vpop.permute.xlu0 %2270
    %2272 = vrot.lane.b32.xlu0 %v2123, 8
    %v2273 = vpop.permute.xlu0 %2272
    %2274 = vrot.lane.b32.xlu0 %v2124, 8
    %v2275 = vpop.permute.xlu0 %2274
    %2276 = vrot.lane.b32.xlu0 %v2125, 8
    %v2277 = vpop.permute.xlu0 %2276
    %2278 = vrot.lane.b32.xlu0 %v2126, 8
    %v2279 = vpop.permute.xlu0 %2278
    %2280 = vrot.lane.b32.xlu0 %v2127, 8
    %v2281 = vpop.permute.xlu0 %2280
    %2282 = vrot.lane.b32.xlu0 %v2128, 8
    %v2283 = vpop.permute.xlu0 %2282
    %2284 = vrot.lane.b32.xlu0 %v2129, 8
    %v2285 = vpop.permute.xlu0 %2284
    %2286 = vrot.lane.b32.xlu0 %v2130, 8
    %v2287 = vpop.permute.xlu0 %2286
    %2288 = vrot.lane.b32.xlu0 %v2131, 8
    %v2289 = vpop.permute.xlu0 %2288
    %2290 = vrot.lane.b32.xlu0 %v2132, 8
    %v2291 = vpop.permute.xlu0 %2290
    %2292 = vrot.lane.b32.xlu0 %v2133, 8
    %v2293 = vpop.permute.xlu0 %2292
    %2294 = vrot.lane.b32.xlu0 %v2134, 8
    %v2295 = vpop.permute.xlu0 %2294
    %2296 = vrot.lane.b32.xlu0 %v2135, 8
    %v2297 = vpop.permute.xlu0 %2296
    %2298 = vrot.lane.b32.xlu0 %v2136, 8
    %v2299 = vpop.permute.xlu0 %2298
    %2300 = vrot.lane.b32.xlu0 %v2137, 8
    %v2301 = vpop.permute.xlu0 %2300
    %2302 = vrot.lane.b32.xlu0 %v2138, 8
    %v2303 = vpop.permute.xlu0 %2302
    %2304 = vrot.lane.b32.xlu0 %v2139, 8
    %v2305 = vpop.permute.xlu0 %2304
    %2306 = vrot.lane.b32.xlu0 %v2140, 8
    %v2307 = vpop.permute.xlu0 %2306
    %2308 = vrot.lane.b32.xlu0 %v2141, 8
    %v2309 = vpop.permute.xlu0 %2308
    %2310 = vrot.lane.b32.xlu0 %v2142, 8
    %v2311 = vpop.permute.xlu0 %2310
    %2312 = vrot.lane.b32.xlu0 %v2143, 8
    %v2313 = vpop.permute.xlu0 %2312
    %2314 = vrot.lane.b32.xlu0 %v2144, 8
    %v2315 = vpop.permute.xlu0 %2314
    %2316 = vrot.lane.b32.xlu0 %v2145, 8
    %v2317 = vpop.permute.xlu0 %2316
    %2318 = vrot.lane.b32.xlu0 %v2146, 8
    %v2319 = vpop.permute.xlu0 %2318
    %2320 = vrot.lane.b32.xlu0 %v2147, 8
    %v2321 = vpop.permute.xlu0 %2320
    %2322 = vrot.lane.b32.xlu0 %v2148, 8
    %v2323 = vpop.permute.xlu0 %2322
    %2324 = vrot.lane.b32.xlu0 %v2149, 8
    %v2325 = vpop.permute.xlu0 %2324
    %2326 = vrot.lane.b32.xlu0 %v2150, 8
    %v2327 = vpop.permute.xlu0 %2326
    %2328 = vrot.lane.b32.xlu0 %v2151, 8
    %v2329 = vpop.permute.xlu0 %2328
    %2330 = vrot.lane.b32.xlu0 %v2152, 8
    %v2331 = vpop.permute.xlu0 %2330
    %2332 = vrot.lane.b32.xlu0 %v2153, 8
    %v2333 = vpop.permute.xlu0 %2332
    %2334 = vrot.lane.b32.xlu0 %v2154, 8
    %v2335 = vpop.permute.xlu0 %2334
    %2336 = vrot.lane.b32.xlu0 %v2155, 8
    %v2337 = vpop.permute.xlu0 %2336
    %2338 = vrot.lane.b32.xlu0 %v2156, 8
    %v2339 = vpop.permute.xlu0 %2338
    %2340 = vrot.lane.b32.xlu0 %v2157, 8
    %v2341 = vpop.permute.xlu0 %2340
    %2342 = vrot.lane.b32.xlu0 %v2158, 8
    %v2343 = vpop.permute.xlu0 %2342
    %2344 = vrot.lane.b32.xlu0 %v2159, 8
    %v2345 = vpop.permute.xlu0 %2344
    %2346 = vrot.lane.b32.xlu0 %v2160, 8
    %v2347 = vpop.permute.xlu0 %2346
    %2348 = vrot.lane.b32.xlu0 %v2161, 8
    %v2349 = vpop.permute.xlu0 %2348
    %2350 = vrot.lane.b32.xlu0 %v2162, 8
    %v2351 = vpop.permute.xlu0 %2350
    %2352 = vrot.lane.b32.xlu0 %v2163, 8
    %v2353 = vpop.permute.xlu0 %2352
    %2354 = vrot.lane.b32.xlu0 %v2164, 8
    %v2355 = vpop.permute.xlu0 %2354
    %2356 = vrot.lane.b32.xlu0 %v2165, 8
    %v2357 = vpop.permute.xlu0 %2356
    %2358 = vrot.lane.b32.xlu0 %v2166, 8
    %v2359 = vpop.permute.xlu0 %2358
    %2360 = vrot.lane.b32.xlu0 %v2167, 8
    %v2361 = vpop.permute.xlu0 %2360
    %2362 = vrot.lane.b32.xlu0 %v2168, 8
    %v2363 = vpop.permute.xlu0 %2362
    %2364 = vrot.lane.b32.xlu0 %v2169, 8
    %v2365 = vpop.permute.xlu0 %2364
    %2434 = vrot.lane.b32.xlu0 %v2110, 16
    %v2435 = vpop.permute.xlu0 %2434
    %2436 = vrot.lane.b32.xlu0 %v2111, 16
    %v2437 = vpop.permute.xlu0 %2436
    %2438 = vrot.lane.b32.xlu0 %v2112, 16
    %v2439 = vpop.permute.xlu0 %2438
    %2440 = vrot.lane.b32.xlu0 %v2113, 16
    %v2441 = vpop.permute.xlu0 %2440
    %2442 = vrot.lane.b32.xlu0 %v2114, 16
    %v2443 = vpop.permute.xlu0 %2442
    %2444 = vrot.lane.b32.xlu0 %v2115, 16
    %v2445 = vpop.permute.xlu0 %2444
    %2446 = vrot.lane.b32.xlu0 %v2116, 16
    %v2447 = vpop.permute.xlu0 %2446
    %2448 = vrot.lane.b32.xlu0 %v2117, 16
    %v2449 = vpop.permute.xlu0 %2448
    %2450 = vrot.lane.b32.xlu0 %v2118, 16
    %v2451 = vpop.permute.xlu0 %2450
    %2452 = vrot.lane.b32.xlu0 %v2119, 16
    %v2453 = vpop.permute.xlu0 %2452
    %2454 = vrot.lane.b32.xlu0 %v2120, 16
    %v2455 = vpop.permute.xlu0 %2454
    %2456 = vrot.lane.b32.xlu0 %v2121, 16
    %v2457 = vpop.permute.xlu0 %2456
    %2458 = vrot.lane.b32.xlu0 %v2122, 16
    %v2459 = vpop.permute.xlu0 %2458
    %2460 = vrot.lane.b32.xlu0 %v2123, 16
    %v2461 = vpop.permute.xlu0 %2460
    %2462 = vrot.lane.b32.xlu0 %v2124, 16
    %v2463 = vpop.permute.xlu0 %2462
    %2464 = vrot.lane.b32.xlu0 %v2125, 16
    %v2465 = vpop.permute.xlu0 %2464
    %2466 = vrot.lane.b32.xlu0 %v2126, 16
    %v2467 = vpop.permute.xlu0 %2466
    %2468 = vrot.lane.b32.xlu0 %v2127, 16
    %v2469 = vpop.permute.xlu0 %2468
    %2470 = vrot.lane.b32.xlu0 %v2128, 16
    %v2471 = vpop.permute.xlu0 %2470
    %2472 = vrot.lane.b32.xlu0 %v2129, 16
    %v2473 = vpop.permute.xlu0 %2472
    %2474 = vrot.lane.b32.xlu0 %v2130, 16
    %v2475 = vpop.permute.xlu0 %2474
    %2476 = vrot.lane.b32.xlu0 %v2131, 16
    %v2477 = vpop.permute.xlu0 %2476
    %2478 = vrot.lane.b32.xlu0 %v2132, 16
    %v2479 = vpop.permute.xlu0 %2478
    %2480 = vrot.lane.b32.xlu0 %v2133, 16
    %v2481 = vpop.permute.xlu0 %2480
    %2482 = vrot.lane.b32.xlu0 %v2134, 16
    %v2483 = vpop.permute.xlu0 %2482
    %2484 = vrot.lane.b32.xlu0 %v2135, 16
    %v2485 = vpop.permute.xlu0 %2484
    %2486 = vrot.lane.b32.xlu0 %v2136, 16
    %v2487 = vpop.permute.xlu0 %2486
    %2488 = vrot.lane.b32.xlu0 %v2137, 16
    %v2489 = vpop.permute.xlu0 %2488
    %2490 = vrot.lane.b32.xlu0 %v2138, 16
    %v2491 = vpop.permute.xlu0 %2490
    %2492 = vrot.lane.b32.xlu0 %v2139, 16
    %v2493 = vpop.permute.xlu0 %2492
    %2494 = vrot.lane.b32.xlu0 %v2140, 16
    %v2495 = vpop.permute.xlu0 %2494
    %2496 = vrot.lane.b32.xlu0 %v2141, 16
    %v2497 = vpop.permute.xlu0 %2496
    %2498 = vrot.lane.b32.xlu0 %v2142, 16
    %v2499 = vpop.permute.xlu0 %2498
    %2500 = vrot.lane.b32.xlu0 %v2143, 16
    %v2501 = vpop.permute.xlu0 %2500
    %2502 = vrot.lane.b32.xlu0 %v2144, 16
    %v2503 = vpop.permute.xlu0 %2502
    %2504 = vrot.lane.b32.xlu0 %v2145, 16
    %v2505 = vpop.permute.xlu0 %2504
    %2506 = vrot.lane.b32.xlu0 %v2146, 16
    %v2507 = vpop.permute.xlu0 %2506
    %2508 = vrot.lane.b32.xlu0 %v2147, 16
    %v2509 = vpop.permute.xlu0 %2508
    %2510 = vrot.lane.b32.xlu0 %v2148, 16
    %v2511 = vpop.permute.xlu0 %2510
    %2512 = vrot.lane.b32.xlu0 %v2149, 16
    %v2513 = vpop.permute.xlu0 %2512
    %2514 = vrot.lane.b32.xlu0 %v2150, 16
    %v2515 = vpop.permute.xlu0 %2514
    %2516 = vrot.lane.b32.xlu0 %v2151, 16
    %v2517 = vpop.permute.xlu0 %2516
    %2518 = vrot.lane.b32.xlu0 %v2152, 16
    %v2519 = vpop.permute.xlu0 %2518
    %2520 = vrot.lane.b32.xlu0 %v2153, 16
    %v2521 = vpop.permute.xlu0 %2520
    %2522 = vrot.lane.b32.xlu0 %v2154, 16
    %v2523 = vpop.permute.xlu0 %2522
    %2524 = vrot.lane.b32.xlu0 %v2155, 16
    %v2525 = vpop.permute.xlu0 %2524
    %2526 = vrot.lane.b32.xlu0 %v2156, 16
    %v2527 = vpop.permute.xlu0 %2526
    %2528 = vrot.lane.b32.xlu0 %v2157, 16
    %v2529 = vpop.permute.xlu0 %2528
    %2530 = vrot.lane.b32.xlu0 %v2158, 16
    %v2531 = vpop.permute.xlu0 %2530
    %2532 = vrot.lane.b32.xlu0 %v2159, 16
    %v2533 = vpop.permute.xlu0 %2532
    %2534 = vrot.lane.b32.xlu0 %v2160, 16
    %v2535 = vpop.permute.xlu0 %2534
    %2536 = vrot.lane.b32.xlu0 %v2161, 16
    %v2537 = vpop.permute.xlu0 %2536
    %2538 = vrot.lane.b32.xlu0 %v2162, 16
    %v2539 = vpop.permute.xlu0 %2538
    %2540 = vrot.lane.b32.xlu0 %v2163, 16
    %v2541 = vpop.permute.xlu0 %2540
    %2542 = vrot.lane.b32.xlu0 %v2164, 16
    %v2543 = vpop.permute.xlu0 %2542
    %2544 = vrot.lane.b32.xlu0 %v2165, 16
    %v2545 = vpop.permute.xlu0 %2544
    %2546 = vrot.lane.b32.xlu0 %v2166, 16
    %v2547 = vpop.permute.xlu0 %2546
    %2548 = vrot.lane.b32.xlu0 %v2167, 16
    %v2549 = vpop.permute.xlu0 %2548
    %2550 = vrot.lane.b32.xlu0 %v2168, 16
    %v2551 = vpop.permute.xlu0 %2550
    %2552 = vrot.lane.b32.xlu0 %v2169, 16
    %v2553 = vpop.permute.xlu0 %2552
    %2554 = vrot.lane.b32.xlu0 %v2170, 16
    %v2555 = vpop.permute.xlu0 %2554
    %2556 = vrot.lane.b32.xlu0 %v2171, 16
    %v2557 = vpop.permute.xlu0 %2556
    %2558 = vrot.lane.b32.xlu0 %v2172, 16
    %v2559 = vpop.permute.xlu0 %2558
    %2560 = vrot.lane.b32.xlu0 %v2173, 16
    %v2561 = vpop.permute.xlu0 %2560
    %v2626 = vsel %vm546, %v2102, %v2239
    %v2627 = vsel %vm546, %v2103, %v2241
    %v2628 = vsel %vm546, %v2104, %v2243
    %v2629 = vsel %vm546, %v2105, %v2245
    %v2630 = vsel %vm546, %v2106, %v2247
    %v2631 = vsel %vm546, %v2107, %v2249
    %v2632 = vsel %vm546, %v2108, %v2251
    %v2633 = vsel %vm546, %v2109, %v2253
    %v2634 = vsel %vm546, %v2110, %v2255
    %v2635 = vsel %vm546, %v2111, %v2257
    %v2636 = vsel %vm546, %v2112, %v2259
    %v2637 = vsel %vm546, %v2113, %v2261
    %v2638 = vsel %vm546, %v2114, %v2263
    %v2639 = vsel %vm546, %v2115, %v2265
    %v2640 = vsel %vm546, %v2116, %v2267
    %v2641 = vsel %vm546, %v2117, %v2269
    %v2642 = vsel %vm546, %v2118, %v2271
    %v2643 = vsel %vm546, %v2119, %v2273
    %v2644 = vsel %vm546, %v2120, %v2275
    %v2645 = vsel %vm546, %v2121, %v2277
    %v2646 = vsel %vm546, %v2122, %v2279
    %v2647 = vsel %vm546, %v2123, %v2281
    %v2648 = vsel %vm546, %v2124, %v2283
    %v2649 = vsel %vm546, %v2125, %v2285
    %v2650 = vsel %vm546, %v2126, %v2287
    %v2651 = vsel %vm546, %v2127, %v2289
    %v2652 = vsel %vm546, %v2128, %v2291
    %v2653 = vsel %vm546, %v2129, %v2293
    %v2654 = vsel %vm546, %v2130, %v2295
    %v2655 = vsel %vm546, %v2131, %v2297
    %v2656 = vsel %vm546, %v2132, %v2299
    %v2657 = vsel %vm546, %v2133, %v2301
    %v2658 = vsel %vm546, %v2134, %v2303
    %v2659 = vsel %vm546, %v2135, %v2305
    %v2660 = vsel %vm546, %v2136, %v2307
    %v2661 = vsel %vm546, %v2137, %v2309
    %v2662 = vsel %vm546, %v2138, %v2311
    %v2663 = vsel %vm546, %v2139, %v2313
    %v2664 = vsel %vm546, %v2140, %v2315
    %v2665 = vsel %vm546, %v2141, %v2317
    %v2666 = vsel %vm546, %v2142, %v2319
    %v2667 = vsel %vm546, %v2143, %v2321
    %v2668 = vsel %vm546, %v2144, %v2323
    %v2669 = vsel %vm546, %v2145, %v2325
    %v2670 = vsel %vm546, %v2146, %v2327
    %v2671 = vsel %vm546, %v2147, %v2329
    %v2672 = vsel %vm546, %v2148, %v2331
    %v2673 = vsel %vm546, %v2149, %v2333
    %v2674 = vsel %vm546, %v2150, %v2335
    %v2675 = vsel %vm546, %v2151, %v2337
    %v2676 = vsel %vm546, %v2152, %v2339
    %v2677 = vsel %vm546, %v2153, %v2341
    %v2678 = vsel %vm546, %v2154, %v2343
    %v2679 = vsel %vm546, %v2155, %v2345
    %v2680 = vsel %vm546, %v2156, %v2347
    %v2681 = vsel %vm546, %v2157, %v2349
    %v2682 = vsel %vm546, %v2158, %v2351
    %v2683 = vsel %vm546, %v2159, %v2353
    %v2684 = vsel %vm546, %v2160, %v2355
    %v2685 = vsel %vm546, %v2161, %v2357
    %v2686 = vsel %vm546, %v2162, %v2359
    %v2687 = vsel %vm546, %v2163, %v2361
    %v2688 = vsel %vm546, %v2164, %v2363
    %v2689 = vsel %vm546, %v2165, %v2365
    %v2690 = vsel %vm611, %v2626, %v2435
    %v2691 = vsel %vm611, %v2627, %v2437
    %v2692 = vsel %vm611, %v2628, %v2439
    %v2693 = vsel %vm611, %v2629, %v2441
    %v2694 = vsel %vm611, %v2630, %v2443
    %v2695 = vsel %vm611, %v2631, %v2445
    %v2696 = vsel %vm611, %v2632, %v2447
    %v2697 = vsel %vm611, %v2633, %v2449
    %v2698 = vsel %vm611, %v2634, %v2451
    %v2699 = vsel %vm611, %v2635, %v2453
    %v2700 = vsel %vm611, %v2636, %v2455
    %v2701 = vsel %vm611, %v2637, %v2457
    %v2702 = vsel %vm611, %v2638, %v2459
    %v2703 = vsel %vm611, %v2639, %v2461
    %v2704 = vsel %vm611, %v2640, %v2463
    %v2705 = vsel %vm611, %v2641, %v2465
    %v2706 = vsel %vm611, %v2642, %v2467
    %v2707 = vsel %vm611, %v2643, %v2469
    %v2708 = vsel %vm611, %v2644, %v2471
    %v2709 = vsel %vm611, %v2645, %v2473
    %v2710 = vsel %vm611, %v2646, %v2475
    %v2711 = vsel %vm611, %v2647, %v2477
    %v2712 = vsel %vm611, %v2648, %v2479
    %v2713 = vsel %vm611, %v2649, %v2481
    %v2714 = vsel %vm611, %v2650, %v2483
    %v2715 = vsel %vm611, %v2651, %v2485
    %v2716 = vsel %vm611, %v2652, %v2487
    %v2717 = vsel %vm611, %v2653, %v2489
    %v2718 = vsel %vm611, %v2654, %v2491
    %v2719 = vsel %vm611, %v2655, %v2493
    %v2720 = vsel %vm611, %v2656, %v2495
    %v2721 = vsel %vm611, %v2657, %v2497
    %v2722 = vsel %vm611, %v2658, %v2499
    %v2723 = vsel %vm611, %v2659, %v2501
    %v2724 = vsel %vm611, %v2660, %v2503
    %v2725 = vsel %vm611, %v2661, %v2505
    %v2726 = vsel %vm611, %v2662, %v2507
    %v2727 = vsel %vm611, %v2663, %v2509
    %v2728 = vsel %vm611, %v2664, %v2511
    %v2729 = vsel %vm611, %v2665, %v2513
    %v2730 = vsel %vm611, %v2666, %v2515
    %v2731 = vsel %vm611, %v2667, %v2517
    %v2732 = vsel %vm611, %v2668, %v2519
    %v2733 = vsel %vm611, %v2669, %v2521
    %v2734 = vsel %vm611, %v2670, %v2523
    %v2735 = vsel %vm611, %v2671, %v2525
    %v2736 = vsel %vm611, %v2672, %v2527
    %v2737 = vsel %vm611, %v2673, %v2529
    %v2738 = vsel %vm611, %v2674, %v2531
    %v2739 = vsel %vm611, %v2675, %v2533
    %v2740 = vsel %vm611, %v2676, %v2535
    %v2741 = vsel %vm611, %v2677, %v2537
    %v2742 = vsel %vm611, %v2678, %v2539
    %v2743 = vsel %vm611, %v2679, %v2541
    %v2744 = vsel %vm611, %v2680, %v2543
    %v2745 = vsel %vm611, %v2681, %v2545
    %v2746 = vsel %vm611, %v2682, %v2547
    %v2747 = vsel %vm611, %v2683, %v2549
    %v2748 = vsel %vm611, %v2684, %v2551
    %v2749 = vsel %vm611, %v2685, %v2553
    %v2750 = vsel %vm611, %v2686, %v2555
    %v2751 = vsel %vm611, %v2687, %v2557
    %v2752 = vsel %vm611, %v2688, %v2559
    %v2753 = vsel %vm611, %v2689, %v2561
    %s2754 = scalar_lea.vmem %s1, 64
    %v2755 = vld [vmem:[%s2754] sm:$0xff]
    %v2756 = vld [vmem:[%s2754 + $0x8] sm:$0xff]
    %v2757 = vld [vmem:[%s2754 + $0x10] sm:$0xff]
    %v2758 = vld [vmem:[%s2754 + $0x18] sm:$0xff]
    %v2760 = vsel %vm1337, %v2755, 0
    %v2763 = vsel %vm1337, %v2756, 0
    %v2766 = vsel %vm1337, %v2757, 0
    %v2769 = vsel %vm1337, %v2758, 0
    %v2772 = vsel %vm1337, %v2690, 0
    %v2775 = vsel %vm1337, %v2691, 0
    %v2778 = vsel %vm1337, %v2692, 0
    %v2781 = vsel %vm1337, %v2693, 0
    %v2784 = vsel %vm1337, %v2694, 0
    %v2787 = vsel %vm1337, %v2695, 0
    %v2790 = vsel %vm1337, %v2696, 0
    %v2793 = vsel %vm1337, %v2697, 0
    %v2796 = vsel %vm1337, %v2698, 0
    %v2799 = vsel %vm1337, %v2699, 0
    %v2802 = vsel %vm1337, %v2700, 0
    %v2805 = vsel %vm1337, %v2701, 0
    %v2808 = vsel %vm1337, %v2702, 0
    %v2811 = vsel %vm1337, %v2703, 0
    %v2814 = vsel %vm1337, %v2704, 0
    %v2817 = vsel %vm1337, %v2705, 0
    %v2820 = vsel %vm1337, %v2706, 0
    %v2823 = vsel %vm1337, %v2707, 0
    %v2826 = vsel %vm1337, %v2708, 0
    %v2829 = vsel %vm1337, %v2709, 0
    %v2832 = vsel %vm1337, %v2710, 0
    %v2835 = vsel %vm1337, %v2711, 0
    %v2838 = vsel %vm1337, %v2712, 0
    %v2841 = vsel %vm1337, %v2713, 0
    %v2844 = vsel %vm1337, %v2714, 0
    %v2847 = vsel %vm1337, %v2715, 0
    %v2850 = vsel %vm1337, %v2716, 0
    %v2853 = vsel %vm1337, %v2717, 0
    %v2856 = vsel %vm1337, %v2718, 0
    %v2859 = vsel %vm1337, %v2719, 0
    %v2862 = vsel %vm1337, %v2720, 0
    %v2865 = vsel %vm1337, %v2721, 0
    %v2868 = vsel %vm1337, %v2722, 0
    %v2871 = vsel %vm1337, %v2723, 0
    %v2874 = vsel %vm1337, %v2724, 0
    %v2877 = vsel %vm1337, %v2725, 0
    %v2880 = vsel %vm1337, %v2726, 0
    %v2883 = vsel %vm1337, %v2727, 0
    %v2886 = vsel %vm1337, %v2728, 0
    %v2889 = vsel %vm1337, %v2729, 0
    %v2892 = vsel %vm1337, %v2730, 0
    %v2895 = vsel %vm1337, %v2731, 0
    %v2898 = vsel %vm1337, %v2732, 0
    %v2901 = vsel %vm1337, %v2733, 0
    %v2904 = vsel %vm1337, %v2734, 0
    %v2907 = vsel %vm1337, %v2735, 0
    %v2910 = vsel %vm1337, %v2736, 0
    %v2913 = vsel %vm1337, %v2737, 0
    %v2916 = vsel %vm1337, %v2738, 0
    %v2919 = vsel %vm1337, %v2739, 0
    %v2922 = vsel %vm1337, %v2740, 0
    %v2925 = vsel %vm1337, %v2741, 0
    %v2928 = vsel %vm1337, %v2742, 0
    %v2931 = vsel %vm1337, %v2743, 0
    %v2934 = vsel %vm1337, %v2744, 0
    %v2937 = vsel %vm1337, %v2745, 0
    %v2940 = vsel %vm1337, %v2746, 0
    %v2943 = vsel %vm1337, %v2747, 0
    %v2946 = vsel %vm1337, %v2748, 0
    %v2949 = vsel %vm1337, %v2749, 0
    %v2952 = vsel %vm1337, %v2750, 0
    %v2955 = vsel %vm1337, %v2751, 0
    %v2958 = vsel %vm1337, %v2752, 0
    %v2961 = vsel %vm1337, %v2753, 0
    %2963 = vmatprep.subr.mxu0 0.0
    %2964 = vmatpush1.xpose.msra.mxu0 %v2772
    %2965 = vmatprep.subr.mxu0 0.0
    %2966 = vmatpush1.xpose.msra.mxu0 %v2775
    %2967 = vmatprep.subr.mxu0 0.0
    %2968 = vmatpush1.xpose.msra.mxu0 %v2778
    %2969 = vmatprep.subr.mxu0 0.0
    %2970 = vmatpush1.xpose.msra.mxu0 %v2781
    %2971 = vmatprep.subr.mxu0 0.0
    %2972 = vmatpush1.xpose.msra.mxu0 %v2784
    %2973 = vmatprep.subr.mxu0 0.0
    %2974 = vmatpush1.xpose.msra.mxu0 %v2787
    %2975 = vmatprep.subr.mxu0 0.0
    %2976 = vmatpush1.xpose.msra.mxu0 %v2790
    %2977 = vmatprep.subr.mxu0 0.0
    %2978 = vmatpush1.xpose.msra.mxu0 %v2793
    %2979 = vmatprep.subr.mxu0 0.0
    %2980 = vmatpush1.xpose.msra.mxu0 %v2796
    %2981 = vmatprep.subr.mxu0 0.0
    %2982 = vmatpush1.xpose.msra.mxu0 %v2799
    %2983 = vmatprep.subr.mxu0 0.0
    %2984 = vmatpush1.xpose.msra.mxu0 %v2802
    %2985 = vmatprep.subr.mxu0 0.0
    %2986 = vmatpush1.xpose.msra.mxu0 %v2805
    %2987 = vmatprep.subr.mxu0 0.0
    %2988 = vmatpush1.xpose.msra.mxu0 %v2808
    %2989 = vmatprep.subr.mxu0 0.0
    %2990 = vmatpush1.xpose.msra.mxu0 %v2811
    %2991 = vmatprep.subr.mxu0 0.0
    %2992 = vmatpush1.xpose.msra.mxu0 %v2814
    %2993 = vmatprep.subr.mxu0 0.0
    %2994 = vmatpush1.xpose.msra.mxu0 %v2817
    %2995 = vmatprep.subr.mxu0 0.0
    %2996 = vmatpush1.xpose.msra.mxu0 %v2820
    %2997 = vmatprep.subr.mxu0 0.0
    %2998 = vmatpush1.xpose.msra.mxu0 %v2823
    %2999 = vmatprep.subr.mxu0 0.0
    %3000 = vmatpush1.xpose.msra.mxu0 %v2826
    %3001 = vmatprep.subr.mxu0 0.0
    %3002 = vmatpush1.xpose.msra.mxu0 %v2829
    %3003 = vmatprep.subr.mxu0 0.0
    %3004 = vmatpush1.xpose.msra.mxu0 %v2832
    %3005 = vmatprep.subr.mxu0 0.0
    %3006 = vmatpush1.xpose.msra.mxu0 %v2835
    %3007 = vmatprep.subr.mxu0 0.0
    %3008 = vmatpush1.xpose.msra.mxu0 %v2838
    %3009 = vmatprep.subr.mxu0 0.0
    %3010 = vmatpush1.xpose.msra.mxu0 %v2841
    %3011 = vmatprep.subr.mxu0 0.0
    %3012 = vmatpush1.xpose.msra.mxu0 %v2844
    %3013 = vmatprep.subr.mxu0 0.0
    %3014 = vmatpush1.xpose.msra.mxu0 %v2847
    %3015 = vmatprep.subr.mxu0 0.0
    %3016 = vmatpush1.xpose.msra.mxu0 %v2850
    %3017 = vmatprep.subr.mxu0 0.0
    %3018 = vmatpush1.xpose.msra.mxu0 %v2853
    %3019 = vmatprep.subr.mxu0 0.0
    %3020 = vmatpush1.xpose.msra.mxu0 %v2856
    %3021 = vmatprep.subr.mxu0 0.0
    %3022 = vmatpush1.xpose.msra.mxu0 %v2859
    %3023 = vmatprep.subr.mxu0 0.0
    %3024 = vmatpush1.xpose.msra.mxu0 %v2862
    %3025 = vmatprep.subr.mxu0 0.0
    %3026 = vmatpush1.xpose.msra.mxu0 %v2865
    %3027 = vmatprep.mubr.f32.mxu0 0.0
    %3028 = vmatmul.mubr.f32.gmra.mrb[0].mxu0 %v2760
    %v3029 = vpop.f32.mrb[0].mxu0
    %v3030 = vadd.f32 0.0, %v3029
    %v3031 = vpop.f32.mrb[0].mxu0
    %v3032 = vadd.f32 0.0, %v3031
    %3033 = vmatprep.mubr.f32.mxu0 0.0
    %3034 = vmatmul.mubr.f32.gmra.mrb[0].mxu0 %v2763
    %v3035 = vpop.f32.mrb[0].mxu0
    %v3036 = vadd.f32 0.0, %v3035
    %v3037 = vpop.f32.mrb[0].mxu0
    %v3038 = vadd.f32 0.0, %v3037
    %3039 = vmatprep.mubr.f32.mxu0 0.0
    %3040 = vmatmul.mubr.f32.gmra.mrb[0].mxu0 %v2766
    %v3041 = vpop.f32.mrb[0].mxu0
    %v3042 = vadd.f32 0.0, %v3041
    %v3043 = vpop.f32.mrb[0].mxu0
    %v3044 = vadd.f32 0.0, %v3043
    %3045 = vmatprep.mubr.f32.mxu0 0.0
    %3046 = vmatmul.mubr.f32.gmra.mrb[0].mxu0 %v2769
    %v3047 = vpop.f32.mrb[0].mxu0
    %v3048 = vadd.f32 0.0, %v3047
    %v3049 = vpop.f32.mrb[0].mxu0
    %v3050 = vadd.f32 0.0, %v3049
    %3051 = vdwg.mxu0
    %3052 = vmatprep.subr.mxu0 0.0
    %3053 = vmatpush1.xpose.msra.mxu0 %v2868
    %3054 = vmatprep.subr.mxu0 0.0
    %3055 = vmatpush1.xpose.msra.mxu0 %v2871
    %3056 = vmatprep.subr.mxu0 0.0
    %3057 = vmatpush1.xpose.msra.mxu0 %v2874
    %3058 = vmatprep.subr.mxu0 0.0
    %3059 = vmatpush1.xpose.msra.mxu0 %v2877
    %3060 = vmatprep.subr.mxu0 0.0
    %3061 = vmatpush1.xpose.msra.mxu0 %v2880
    %3062 = vmatprep.subr.mxu0 0.0
    %3063 = vmatpush1.xpose.msra.mxu0 %v2883
    %3064 = vmatprep.subr.mxu0 0.0
    %3065 = vmatpush1.xpose.msra.mxu0 %v2886
    %3066 = vmatprep.subr.mxu0 0.0
    %3067 = vmatpush1.xpose.msra.mxu0 %v2889
    %3068 = vmatprep.subr.mxu0 0.0
    %3069 = vmatpush1.xpose.msra.mxu0 %v2892
    %3070 = vmatprep.subr.mxu0 0.0
    %3071 = vmatpush1.xpose.msra.mxu0 %v2895
    %3072 = vmatprep.subr.mxu0 0.0
    %3073 = vmatpush1.xpose.msra.mxu0 %v2898
    %3074 = vmatprep.subr.mxu0 0.0
    %3075 = vmatpush1.xpose.msra.mxu0 %v2901
    %3076 = vmatprep.subr.mxu0 0.0
    %3077 = vmatpush1.xpose.msra.mxu0 %v2904
    %3078 = vmatprep.subr.mxu0 0.0
    %3079 = vmatpush1.xpose.msra.mxu0 %v2907
    %3080 = vmatprep.subr.mxu0 0.0
    %3081 = vmatpush1.xpose.msra.mxu0 %v2910
    %3082 = vmatprep.subr.mxu0 0.0
    %3083 = vmatpush1.xpose.msra.mxu0 %v2913
    %3084 = vmatprep.subr.mxu0 0.0
    %3085 = vmatpush1.xpose.msra.mxu0 %v2916
    %3086 = vmatprep.subr.mxu0 0.0
    %3087 = vmatpush1.xpose.msra.mxu0 %v2919
    %3088 = vmatprep.subr.mxu0 0.0
    %3089 = vmatpush1.xpose.msra.mxu0 %v2922
    %3090 = vmatprep.subr.mxu0 0.0
    %3091 = vmatpush1.xpose.msra.mxu0 %v2925
    %3092 = vmatprep.subr.mxu0 0.0
    %3093 = vmatpush1.xpose.msra.mxu0 %v2928
    %3094 = vmatprep.subr.mxu0 0.0
    %3095 = vmatpush1.xpose.msra.mxu0 %v2931
    %3096 = vmatprep.subr.mxu0 0.0
    %3097 = vmatpush1.xpose.msra.mxu0 %v2934
    %3098 = vmatprep.subr.mxu0 0.0
    %3099 = vmatpush1.xpose.msra.mxu0 %v2937
    %3100 = vmatprep.subr.mxu0 0.0
    %3101 = vmatpush1.xpose.msra.mxu0 %v2940
    %3102 = vmatprep.subr.mxu0 0.0
    %3103 = vmatpush1.xpose.msra.mxu0 %v2943
    %3104 = vmatprep.subr.mxu0 0.0
    %3105 = vmatpush1.xpose.msra.mxu0 %v2946
    %3106 = vmatprep.subr.mxu0 0.0
    %3107 = vmatpush1.xpose.msra.mxu0 %v2949
    %3108 = vmatprep.subr.mxu0 0.0
    %3109 = vmatpush1.xpose.msra.mxu0 %v2952
    %3110 = vmatprep.subr.mxu0 0.0
    %3111 = vmatpush1.xpose.msra.mxu0 %v2955
    %3112 = vmatprep.subr.mxu0 0.0
    %3113 = vmatpush1.xpose.msra.mxu0 %v2958
    %3114 = vmatprep.subr.mxu0 0.0
    %3115 = vmatpush1.xpose.msra.mxu0 %v2961
    %3116 = vmatprep.mubr.f32.mxu0 0.0
    %3117 = vmatmul.mubr.f32.gmra.mrb[0].mxu0 %v2760
    %v3118 = vpop.f32.mrb[0].mxu0
    %v3119 = vadd.f32 0.0, %v3118
    %v3120 = vpop.f32.mrb[0].mxu0
    %v3121 = vadd.f32 0.0, %v3120
    %3122 = vmatprep.mubr.f32.mxu0 0.0
    %3123 = vmatmul.mubr.f32.gmra.mrb[0].mxu0 %v2763
    %v3124 = vpop.f32.mrb[0].mxu0
    %v3125 = vadd.f32 0.0, %v3124
    %v3126 = vpop.f32.mrb[0].mxu0
    %v3127 = vadd.f32 0.0, %v3126
    %3128 = vmatprep.mubr.f32.mxu0 0.0
    %3129 = vmatmul.mubr.f32.gmra.mrb[0].mxu0 %v2766
    %v3130 = vpop.f32.mrb[0].mxu0
    %v3131 = vadd.f32 0.0, %v3130
    %v3132 = vpop.f32.mrb[0].mxu0
    %v3133 = vadd.f32 0.0, %v3132
    %3134 = vmatprep.mubr.f32.mxu0 0.0
    %3135 = vmatmul.mubr.f32.gmra.mrb[0].mxu0 %v2769
    %v3136 = vpop.f32.mrb[0].mxu0
    %v3137 = vadd.f32 0.0, %v3136
    %v3138 = vpop.f32.mrb[0].mxu0
    %v3139 = vadd.f32 0.0, %v3138
    %3140 = vdwg.mxu0
    %v3141 = vadd.f32 %v1991, %v3030
    %v3142 = vadd.f32 %v1993, %v3032
    %v3143 = vadd.f32 %v2080, %v3119
    %v3144 = vadd.f32 %v2082, %v3121
    %v3145 = vadd.f32 %v1997, %v3036
    %v3146 = vadd.f32 %v1999, %v3038
    %v3147 = vadd.f32 %v2086, %v3125
    %v3148 = vadd.f32 %v2088, %v3127
    %v3149 = vadd.f32 %v2003, %v3042
    %v3150 = vadd.f32 %v2005, %v3044
    %v3151 = vadd.f32 %v2092, %v3131
    %v3152 = vadd.f32 %v2094, %v3133
    %v3153 = vadd.f32 %v2009, %v3048
    %v3154 = vadd.f32 %v2011, %v3050
    %v3155 = vadd.f32 %v2098, %v3137
    %v3156 = vadd.f32 %v2100, %v3139
    %v3157 = vld [vmem:[%s2] sm:$0xff]
    %v3158 = vld [vmem:[%s2 + $0x8] sm:$0xff]
    %v3159 = vld [vmem:[%s2 + $0x10] sm:$0xff]
    %v3160 = vld [vmem:[%s2 + $0x18] sm:$0xff]
    %3162 = vset.pattern.permute.xlu0 0
    %3163 = vperm.xlu0 %3162, %v3157
    %v3164 = vpop.permute.xlu0 %3163
    %3167 = vset.pattern.permute.xlu0 0
    %3168 = vperm.xlu0 %3167, %v3158
    %v3169 = vpop.permute.xlu0 %3168
    %3172 = vset.pattern.permute.xlu0 0
    %3173 = vperm.xlu0 %3172, %v3159
    %v3174 = vpop.permute.xlu0 %3173
    %3177 = vset.pattern.permute.xlu0 0
    %3178 = vperm.xlu0 %3177, %v3160
    %v3179 = vpop.permute.xlu0 %3178
    %v3181 = vadd.f32 %v3141, %v3164
    %v3182 = vadd.f32 %v3142, %v3164
    %v3183 = vadd.f32 %v3143, %v3164
    %v3184 = vadd.f32 %v3144, %v3164
    %v3185 = vadd.f32 %v3145, %v3169
    %v3186 = vadd.f32 %v3146, %v3169
    %v3187 = vadd.f32 %v3147, %v3169
    %v3188 = vadd.f32 %v3148, %v3169
    %v3189 = vadd.f32 %v3149, %v3174
    %v3190 = vadd.f32 %v3150, %v3174
    %v3191 = vadd.f32 %v3151, %v3174
    %v3192 = vadd.f32 %v3152, %v3174
    %v3193 = vadd.f32 %v3153, %v3179
    %v3194 = vadd.f32 %v3154, %v3179
    %v3195 = vadd.f32 %v3155, %v3179
    %v3196 = vadd.f32 %v3156, %v3179
    %s3197 = sld [smem:[#allocation2]]
    %vm3198 = vcmp.ge.f32.partialorder %v3181, 0.0
    %vm3199 = vcmp.ge.f32.partialorder %v3182, 0.0
    %vm3200 = vcmp.ge.f32.partialorder %v3183, 0.0
    %vm3201 = vcmp.ge.f32.partialorder %v3184, 0.0
    %vm3202 = vcmp.ge.f32.partialorder %v3185, 0.0
    %vm3203 = vcmp.ge.f32.partialorder %v3186, 0.0
    %vm3204 = vcmp.ge.f32.partialorder %v3187, 0.0
    %vm3205 = vcmp.ge.f32.partialorder %v3188, 0.0
    %vm3206 = vcmp.ge.f32.partialorder %v3189, 0.0
    %vm3207 = vcmp.ge.f32.partialorder %v3190, 0.0
    %vm3208 = vcmp.ge.f32.partialorder %v3191, 0.0
    %vm3209 = vcmp.ge.f32.partialorder %v3192, 0.0
    %vm3210 = vcmp.ge.f32.partialorder %v3193, 0.0
    %vm3211 = vcmp.ge.f32.partialorder %v3194, 0.0
    %vm3212 = vcmp.ge.f32.partialorder %v3195, 0.0
    %vm3213 = vcmp.ge.f32.partialorder %v3196, 0.0
    %v3214 = vstv %s3197
    %v3215 = vmul.f32 %v3214, %v3181
    %v3216 = vmul.f32 %v3214, %v3182
    %v3217 = vmul.f32 %v3214, %v3183
    %v3218 = vmul.f32 %v3214, %v3184
    %v3219 = vmul.f32 %v3214, %v3185
    %v3220 = vmul.f32 %v3214, %v3186
    %v3221 = vmul.f32 %v3214, %v3187
    %v3222 = vmul.f32 %v3214, %v3188
    %v3223 = vmul.f32 %v3214, %v3189
    %v3224 = vmul.f32 %v3214, %v3190
    %v3225 = vmul.f32 %v3214, %v3191
    %v3226 = vmul.f32 %v3214, %v3192
    %v3227 = vmul.f32 %v3214, %v3193
    %v3228 = vmul.f32 %v3214, %v3194
    %v3229 = vmul.f32 %v3214, %v3195
    %v3230 = vmul.f32 %v3214, %v3196
    %v3231 = vsel %vm3198, %v3181, %v3215
    %v3232 = vsel %vm3199, %v3182, %v3216
    %v3233 = vsel %vm3200, %v3183, %v3217
    %v3234 = vsel %vm3201, %v3184, %v3218
    %v3235 = vsel %vm3202, %v3185, %v3219
    %v3236 = vsel %vm3203, %v3186, %v3220
    %v3237 = vsel %vm3204, %v3187, %v3221
    %v3238 = vsel %vm3205, %v3188, %v3222
    %v3239 = vsel %vm3206, %v3189, %v3223
    %v3240 = vsel %vm3207, %v3190, %v3224
    %v3241 = vsel %vm3208, %v3191, %v3225
    %v3242 = vsel %vm3209, %v3192, %v3226
    %v3243 = vsel %vm3210, %v3193, %v3227
    %v3244 = vsel %vm3211, %v3194, %v3228
    %v3245 = vsel %vm3212, %v3195, %v3229
    %v3246 = vsel %vm3213, %v3196, %v3230
    %3247 = vst [vmem:[#allocation3] sm:$0xff] %v3231
    %3248 = vst [vmem:[#allocation3 + $0x8] sm:$0xff] %v3232
    %3249 = vst [vmem:[#allocation3 + $0x10] sm:$0xff] %v3233
    %3250 = vst [vmem:[#allocation3 + $0x18] sm:$0xff] %v3234
    %3251 = vst [vmem:[#allocation3 + $0x20] sm:$0xff] %v3235
    %3252 = vst [vmem:[#allocation3 + $0x28] sm:$0xff] %v3236
    %3253 = vst [vmem:[#allocation3 + $0x30] sm:$0xff] %v3237
    %3254 = vst [vmem:[#allocation3 + $0x38] sm:$0xff] %v3238
    %3255 = vst [vmem:[#allocation3 + $0x40] sm:$0xff] %v3239
    %3256 = vst [vmem:[#allocation3 + $0x48] sm:$0xff] %v3240
    %3257 = vst [vmem:[#allocation3 + $0x50] sm:$0xff] %v3241
    %3258 = vst [vmem:[#allocation3 + $0x58] sm:$0xff] %v3242
    %3259 = vst [vmem:[#allocation3 + $0x60] sm:$0xff] %v3243
    %3260 = vst [vmem:[#allocation3 + $0x68] sm:$0xff] %v3244
    %3261 = vst [vmem:[#allocation3 + $0x70] sm:$0xff] %v3245
    %3262 = vst [vmem:[#allocation3 + $0x78] sm:$0xff] %v3246
    // Predicated region
    $region18: #{tpu_custom_call.1} parent=1 // pred_check
      _
    $region19: #{tpu_custom_call.1} parent=1 // pred_check_branch
      %3264 = sbr.rel (0) target = $region21
    $region20: #{tpu_custom_call.1} parent=1 // pred_region
      %s3266 = ssub.s32 2048, 2048
      %3267 = vsyncadd [#allocation4], %s3266
      %s3268 = sshll.u32 [#allocation3], 4
      %s3269 = int_to_ptr.vmem [resolvable:$true] %s3268
      %3274 = dma.vmem_to_hbm [thread:$0]  %s3269, 2048, %s4, [#allocation4], 512, 512, 32
    $region21: #{tpu_custom_call.1} parent=1 // pred_fallthru
      _
    // Predicated region
    $region22: #{tpu_custom_call.1} parent=1 // pred_check
      _
    $region23: #{tpu_custom_call.1} parent=1 // pred_check_branch
      %3276 = sbr.rel (0) target = $region25
    $region24: #{tpu_custom_call.1} parent=1 // pred_region
      %3277 = dma.done [#allocation4], 2048
    $region25: #{tpu_custom_call.1} parent=1 // pred_fallthru
      _
    %3278 = vsyncpa [#allocation4], 1

</llo_original>
